<compile_context>
chip_gen: v7x
topology: tpu7x:2x2x1
jax: 0.10.0
libtpu: 0.0.40
codegen_flags: <defaults>
</compile_context>

<pallas_src>
import functools
import math

import numpy as np
import jax
import jax.numpy as jnp
from jax.experimental import pallas as pl
from jax.experimental.pallas import tpu as pltpu


# Rows of the packed per-block vector tensor ("vecs", shape [_VEC_ROWS, D_PAD]).
(_ROW_BQ, _ROW_BO, _ROW_B2, _ROW_G1, _ROW_BLN1, _ROW_G2, _ROW_BLN2,
 _ROW_MASK, _ROW_A1, _ROW_A2) = range(10)
_VEC_ROWS = 16   # padded to a multiple of 8 sublanes


# ----------------------------------------------------------------------------
# Pallas kernels
# ----------------------------------------------------------------------------

def _embed_kernel(x_ref, w_ref, b_ref, pos_ref, o_ref):
    """o[b] = x[b] @ W + bias + pos  (both Conv1d projections fused via im2col)."""
    y = jnp.dot(x_ref[...].astype(jnp.bfloat16), w_ref[...],
                preferred_element_type=jnp.float32)
    o_ref[...] = (y + b_ref[...] + pos_ref[...]).astype(o_ref.dtype)


def _block_kernel(xq_ref, xkv_ref, wq_ref, wkv_ref, bkv_ref, wo_ref,
                  w1_ref, b1_ref, w2_ref, vecs_ref, o_ref,
                  *, n_heads, dh_pad, inv_d, eps):
    """Fused transformer block for one batch element.

    Self-attention block: xq == xkv.  Cross-attention block: xq = tokens, xkv = visible.
    All tensors are in the head-padded layout; padded lanes stay exactly zero.
    """
    bf16 = jnp.bfloat16

    def mm(a, w):
        # MXU in bf16 (weights already stored bf16), accumulate in f32.
        return jnp.dot(a.astype(bf16), w, preferred_element_type=jnp.float32)

    xq = xq_ref[...]                       # [Tq, D]  queries / residual stream
    xkv = xkv_ref[...]                     # [Tk, D]  keys & values source
    D = xq.shape[-1]

    bq   = vecs_ref[_ROW_BQ:_ROW_BQ + 1, :]
    bo   = vecs_ref[_ROW_BO:_ROW_BO + 1, :]
    b2   = vecs_ref[_ROW_B2:_ROW_B2 + 1, :]
    g1   = vecs_ref[_ROW_G1:_ROW_G1 + 1, :]
    bln1 = vecs_ref[_ROW_BLN1:_ROW_BLN1 + 1, :]
    g2   = vecs_ref[_ROW_G2:_ROW_G2 + 1, :]
    bln2 = vecs_ref[_ROW_BLN2:_ROW_BLN2 + 1, :]
    mask = vecs_ref[_ROW_MASK:_ROW_MASK + 1, :]       # 1.0 on live lanes, 0.0 on padding
    a1   = vecs_ref[_ROW_A1:_ROW_A1 + 1, 0:1]         # learnable residual scales
    a2   = vecs_ref[_ROW_A2:_ROW_A2 + 1, 0:1]

    # ---- attention (1/sqrt(dh) folded into Wq at init) ---------------------
    q = mm(xq, wq_ref[...]) + bq                       # [Tq, D]
    kv = mm(xkv, wkv_ref[...]) + bkv_ref[...]          # [Tk, 2D]  (K and V fused)
    k = kv[:, :D]
    v = kv[:, D:]

    heads = []
    for h in range(n_heads):                           # statically unrolled
        lo = h * dh_pad
        qh = q[:, lo:lo + dh_pad]
        kh = k[:, lo:lo + dh_pad]
        vh = v[:, lo:lo + dh_pad]
        # q @ k^T as a contraction (no materialized transpose).
        s = jax.lax.dot_general(qh.astype(bf16), kh.astype(bf16),
                                (((1,), (1,)), ((), ())),
                                preferred_element_type=jnp.float32)
        m = jnp.max(s, axis=-1, keepdims=True)
        p = jnp.exp(s - m)
        p = p * pl.reciprocal(jnp.sum(p, axis=-1, keepdims=True), approx=True)
        heads.append(mm(p, vh.astype(bf16)))           # [Tq, dh_pad]
    attn = jnp.concatenate(heads, axis=-1)             # [Tq, D]
    attn = mm(attn, wo_ref[...]) + bo

    # ---- residual + LayerNorm over the live lanes --------------------------
    def res_ln(x, y, a, g, b):
        z = x + a * y                                   # padded lanes stay zero
        mu = jnp.sum(z, axis=-1, keepdims=True) * inv_d
        c = (z - mu) * mask
        var = jnp.sum(c * c, axis=-1, keepdims=True) * inv_d
        return c * jax.lax.rsqrt(var + eps) * g + b

    x2 = res_ln(xq, attn, a1, g1, bln1)

    # ---- feed-forward -------------------------------------------------------
    h1 = jax.nn.gelu(mm(x2, w1_ref[...]) + b1_ref[...])   # tanh approx (see TODO)
    ffn = mm(h1, w2_ref[...]) + b2
    o_ref[...] = res_ln(x2, ffn, a2, g2, bln2).astype(o_ref.dtype)


# ----------------------------------------------------------------------------
# pallas_call wrappers
# ----------------------------------------------------------------------------

def embed(x_cat, w, b, pos):
    """[B, T, Cin] @ [Cin, D_PAD] + bias + pos  -> [B, T, D_PAD]."""
    B, T, Cin = x_cat.shape
    Dp = w.shape[1]
    return pl.pallas_call(
        _embed_kernel,
        out_shape=jax.ShapeDtypeStruct((B, T, Dp), jnp.float32),
        grid=(B,),
        in_specs=[
            pl.BlockSpec((None, T, Cin), lambda b_: (b_, 0, 0)),
            pl.BlockSpec((Cin, Dp), lambda b_: (0, 0)),
            pl.BlockSpec((1, Dp), lambda b_: (0, 0)),
            pl.BlockSpec((T, Dp), lambda b_: (0, 0)),
        ],
        out_specs=pl.BlockSpec((None, T, Dp), lambda b_: (b_, 0, 0)),
        compiler_params=pltpu.CompilerParams(dimension_semantics=("parallel",)),
    )(x_cat, w, b, pos)


def fused_block(xq, xkv, p, *, n_heads, dh_pad, d_real):
    """One whole transformer block (self- or cross-attention) in a single pallas_call."""
    B, Tq, D = xq.shape
    Tk = xkv.shape[1]
    F = p["w1"].shape[1]
    kern = functools.partial(_block_kernel, n_heads=n_heads, dh_pad=dh_pad,
                             inv_d=1.0 / float(d_real), eps=1e-5)
    return pl.pallas_call(
        kern,
        out_shape=jax.ShapeDtypeStruct((B, Tq, D), jnp.float32),
        grid=(B,),
        in_specs=[
            pl.BlockSpec((None, Tq, D), lambda b: (b, 0, 0)),
            pl.BlockSpec((None, Tk, D), lambda b: (b, 0, 0)),
            pl.BlockSpec((D, D), lambda b: (0, 0)),          # wq (scale folded in, bf16)
            pl.BlockSpec((D, 2 * D), lambda b: (0, 0)),      # wkv (bf16)
            pl.BlockSpec((1, 2 * D), lambda b: (0, 0)),      # bkv
            pl.BlockSpec((D, D), lambda b: (0, 0)),          # wo (bf16)
            pl.BlockSpec((D, F), lambda b: (0, 0)),          # w1 (bf16)
            pl.BlockSpec((1, F), lambda b: (0, 0)),          # b1
            pl.BlockSpec((F, D), lambda b: (0, 0)),          # w2 (bf16)
            pl.BlockSpec((_VEC_ROWS, D), lambda b: (0, 0)),  # packed vectors
        ],
        out_specs=pl.BlockSpec((None, Tq, D), lambda b: (b, 0, 0)),
        compiler_params=pltpu.CompilerParams(dimension_semantics=("parallel",)),
    )(xq, xkv, p["wq"], p["wkv"], p["bkv"], p["wo"], p["w1"], p["b1"], p["w2"], p["vecs"])


# ----------------------------------------------------------------------------
# Parameter init (deterministic, synthetic) in the head-padded layout
# ----------------------------------------------------------------------------

def _round_up(x, m):
    return (x + m - 1) // m * m


def _scatter_cols(w, cols, ncols):
    out = jnp.zeros(w.shape[:-1] + (ncols,), jnp.float32)
    return out.at[..., cols].set(w)


def _scatter_2d(w, rows, cols, nrows, ncols):
    out = jnp.zeros((nrows, ncols), jnp.float32)
    return out.at[rows[:, None], cols[None, :]].set(w)


def _sinusoid_table(n_position, d_hid):
    pos = np.arange(n_position)[:, None].astype(np.float64)
    hid = np.arange(d_hid)[None, :]
    angle = pos / np.power(10000, 2 * (hid // 2) / d_hid)
    table = np.zeros((n_position, d_hid), dtype=np.float64)
    table[:, 0::2] = np.sin(angle[:, 0::2])
    table[:, 1::2] = np.cos(angle[:, 1::2])
    return jnp.asarray(table, dtype=jnp.float32)


def _init_block(key, d, dff, n_heads, pad_idx, d_pad, f_pad):
    ks_ = jax.random.split(key, 6)
    w = lambda k, s: (0.02 * jax.random.normal(k, s)).astype(jnp.float32)
    dh = d // n_heads
    scale = 1.0 / math.sqrt(dh)

    f_idx = jnp.arange(dff, dtype=jnp.int32)
    wq = w(ks_[0], (d, d)) * scale          # fold the attention scale into Wq
    wk = w(ks_[1], (d, d))
    wv = w(ks_[2], (d, d))
    wo = w(ks_[3], (d, d))
    w1 = w(ks_[4], (d, dff))
    w2 = w(ks_[5], (dff, d))

    bf16 = jnp.bfloat16
    wq_p = _scatter_2d(wq, pad_idx, pad_idx, d_pad, d_pad).astype(bf16)
    wk_p = _scatter_2d(wk, pad_idx, pad_idx, d_pad, d_pad).astype(bf16)
    wv_p = _scatter_2d(wv, pad_idx, pad_idx, d_pad, d_pad).astype(bf16)
    wo_p = _scatter_2d(wo, pad_idx, pad_idx, d_pad, d_pad).astype(bf16)
    w1_p = _scatter_2d(w1, pad_idx, f_idx, d_pad, f_pad).astype(bf16)
    w2_p = _scatter_2d(w2, f_idx, pad_idx, f_pad, d_pad).astype(bf16)

    live = jnp.zeros((d_pad,), jnp.float32).at[pad_idx].set(1.0)
    vecs = jnp.zeros((_VEC_ROWS, d_pad), jnp.float32)
    vecs = vecs.at[_ROW_G1].set(live).at[_ROW_G2].set(live).at[_ROW_MASK].set(live)
    vecs = vecs.at[_ROW_A1, 0].set(1.0).at[_ROW_A2, 0].set(1.0)
    # Rows BQ/BO/B2/BLN1/BLN2 stay zero (zero-initialized biases).

    return dict(
        wq=wq_p,
        wkv=jnp.concatenate([wk_p, wv_p], axis=1),
        bkv=jnp.zeros((1, 2 * d_pad), jnp.float32),
        wo=wo_p,
        w1=w1_p,
        b1=jnp.zeros((1, f_pad), jnp.float32),
        w2=w2_p,
        vecs=vecs,
    )


def init_layer_params(key, *, idx, input_channel, d_model_list, kernel_size,
                      layers, max_len, d_ffn, n_heads):
    d_model = d_model_list[idx]
    d_pad = _round_up(max(d_model, 128), 128)
    assert d_pad % n_heads == 0, "n_heads must divide the padded model dim"
    dh_pad = d_pad // n_heads
    dh = d_model // n_heads
    assert dh_pad >= dh
    f_pad = _round_up(max(d_ffn, 128), 128)

    # Map real feature (h * dh + j) -> padded lane (h * dh_pad + j).
    pad_idx = jnp.asarray(
        [h * dh_pad + j for h in range(n_heads) for j in range(dh)], dtype=jnp.int32)

    out_channel = int(2 * d_model / 3) if idx != 0 else d_model

    keys = jax.random.split(key, 4 + layers + 4)
    w = lambda k, s: (0.02 * jax.random.normal(k, s)).astype(jnp.float32)

    # input_projection: Conv1d(C, out_channel, kernel=ks, stride=ks) as im2col matrix.
    w_in = w(keys[0], (out_channel, input_channel, kernel_size))
    w_in_mat = w_in.reshape(out_channel, input_channel * kernel_size).T   # [C*ks, out_ch]

    if idx != 0:
        d_prev = d_model_list[idx - 1]
        # last_projection: Conv1d(d_prev, d_model//3, kernel=1) == per-position matmul.
        w_last = w(keys[1], (d_model // 3, d_prev, 1))
        w_last_mat = w_last[:, :, 0].T                                    # [d_prev, d//3]
        cin = input_channel * kernel_size + d_prev
        w_comb = jnp.zeros((cin, d_model), jnp.float32)
        w_comb = w_comb.at[:input_channel * kernel_size, :out_channel].set(w_in_mat)
        w_comb = w_comb.at[input_channel * kernel_size:, out_channel:].set(w_last_mat)
    else:
        cin = input_channel * kernel_size
        w_comb = w_in_mat

    params = dict(
        w_embed=_scatter_cols(w_comb, pad_idx, d_pad).astype(jnp.bfloat16),  # [cin, d_pad]
        b_embed=jnp.zeros((1, d_pad), jnp.float32),
        imp_token=_scatter_cols(
            jax.random.normal(keys[2], (d_model,)).astype(jnp.float32), pad_idx, d_pad),
        pos_table=_scatter_cols(_sinusoid_table(max_len, d_model), pad_idx, d_pad),
        pad_idx=pad_idx,
        encoder=[_init_block(keys[4 + i], d_model, d_ffn, n_heads, pad_idx, d_pad, f_pad)
                 for i in range(layers)],
        imputation=[_init_block(keys[4 + layers + i], d_model, d_ffn, n_heads, pad_idx,
                                d_pad, f_pad) for i in range(4)],
    )
    cfg = dict(idx=idx, ks=kernel_size, n_heads=n_heads,
               d_model=d_model, d_pad=d_pad, dh_pad=dh_pad)
    return params, cfg


# ----------------------------------------------------------------------------
# Layer.forward
# ----------------------------------------------------------------------------

def layer_forward(params, last_layer_out, x_now, index_now, index_next,
                  *, idx, ks, n_heads, d_model, d_pad, dh_pad):
    B, C, L = x_now.shape
    Lout = L // ks

    # Strided Conv1d as im2col (plain-JAX glue) feeding the fused embed kernel.
    patches = x_now.reshape(B, C, Lout, ks).transpose(0, 2, 1, 3).reshape(B, Lout, C * ks)
    if idx != 0:
        x_cat = jnp.concatenate([patches, last_layer_out], axis=2)   # [B, Lout, C*ks+Dp]
    else:
        x_cat = patches

    index_now = index_now[ks - 1::ks]                                # [Lout]
    pos_now = params["pos_table"][index_now]                         # [Lout, d_pad]

    # input_projection (+ last_projection) + positional encoding, one pallas_call.
    inp = embed(x_cat, params["w_embed"], params["b_embed"], pos_now)

    # Imputation tokens; pad the token count to a sublane multiple of 8 so the
    # cross-attention blocks store full (8,128) tiles (padded zero rows are safe
    # row-wise through softmax / LayerNorm and are sliced off below).
    Tn = index_next.shape[0]
    Tn_pad = max(_round_up(Tn, 8), 8)
    pos_next = params["pos_table"][index_next]                       # [Tn, d_pad]
    token_next = params["imp_token"][None, :] + pos_next             # [Tn, d_pad]
    if Tn_pad != Tn:
        token_next = jnp.pad(token_next, ((0, Tn_pad - Tn), (0, 0)))
    token_next = jnp.broadcast_to(token_next[None], (B, Tn_pad, d_pad))

    out = inp
    for blk in params["encoder"]:                                    # self-attention
        out = fused_block(out, out, blk, n_heads=n_heads, dh_pad=dh_pad, d_real=d_model)

    tok = token_next
    for blk in params["imputation"]:                                 # cross-attention
        tok = fused_block(tok, out, blk, n_heads=n_heads, dh_pad=dh_pad, d_real=d_model)
    tok = tok[:, :Tn, :]

    # Drop the padded lanes to recover the reference [*, d_model] layout.
    out_real = out[..., params["pad_idx"]]
    tok_real = tok[..., params["pad_idx"]]
    return out_real, tok_real, index_now


# ----------------------------------------------------------------------------
# Demo
# ----------------------------------------------------------------------------

if __name__ == "__main__":
    # small config
    B, C, L = 2, 4, 16            # x_now: [batch, input_channel, seq points]
    ks = 2                        # kernel_size == stride
    d_model_list = [24, 48]
    idx = 1                       # exercise both input_projection and last_projection
    attn_heads = 4
    d_ffn = 64
    enc_layers = 2
    max_len = 16                  # args.seq_len -> PositionalEncoding n_position

    key = jax.random.PRNGKey(0)
    kp, kx, kl = jax.random.split(key, 3)

    params, cfg = init_layer_params(
        kp, idx=idx, input_channel=C, d_model_list=d_model_list,
        kernel_size=ks, layers=enc_layers, max_len=max_len,
        d_ffn=d_ffn, n_heads=attn_heads)

    x_now = jax.random.normal(kx, (B, C, L), dtype=jnp.float32)
    last_layer_out = jax.random.normal(kl, (B, L // ks, d_model_list[idx - 1]),
                                       dtype=jnp.float32)
    index_now = jnp.arange(L, dtype=jnp.int32)                 # [16]
    index_next = jnp.array([3, 7, 11, 15], dtype=jnp.int32)    # [4]

    run = jax.jit(functools.partial(layer_forward, **cfg))
    out, next_imp, idx_now = run(params, last_layer_out, x_now, index_now, index_next)

    jax.block_until_ready((out, next_imp, idx_now))
    assert out.shape == (B, L // ks, d_model_list[idx])
    assert next_imp.shape == (B, index_next.shape[0], d_model_list[idx])
    assert idx_now.shape == (L // ks,)
    assert bool(jnp.all(jnp.isfinite(out))) and bool(jnp.all(jnp.isfinite(next_imp)))
    print("KERNEL_OK")
</pallas_src>

<mosaic_0001>
module attributes {stable_mosaic.version = 11 : i64} {
  func.func @_embed_kernel(%arg0: i32, %arg1: memref<1x8x32xf32, #tpu.memory_space<vmem>>, %arg2: memref<32x128xbf16, #tpu.memory_space<vmem>>, %arg3: memref<1x128xf32, #tpu.memory_space<vmem>>, %arg4: memref<8x128xf32, #tpu.memory_space<vmem>>, %arg5: memref<1x8x128xf32, #tpu.memory_space<vmem>>) attributes {dimension_semantics = [#tpu.dimension_semantics<parallel>], iteration_bounds = array<i64: 2>, scalar_prefetch = 0 : i64, scratch_operands = 0 : i64, tpu.core_type = #tpu.core_type<tc>, window_params = [{transform_indices = @transform_0, window_bounds = array<i64: 1, 8, 32>}, {pipeline_mode = #tpu.pipeline_mode<synchronous>, transform_indices = @transform_1, window_bounds = array<i64: 32, 128>}, {pipeline_mode = #tpu.pipeline_mode<synchronous>, transform_indices = @transform_2, window_bounds = array<i64: 1, 128>}, {pipeline_mode = #tpu.pipeline_mode<synchronous>, transform_indices = @transform_3, window_bounds = array<i64: 8, 128>}, {transform_indices = @transform_4, window_bounds = array<i64: 1, 8, 128>}]} {
    %c0 = arith.constant 0 : index
    %c0_0 = arith.constant 0 : index
    %c0_1 = arith.constant 0 : index
    %0 = vector.load %arg1[%c0, %c0_0, %c0_1] : memref<1x8x32xf32, #tpu.memory_space<vmem>>, vector<1x8x32xf32>
    %1 = vector.shape_cast %0 : vector<1x8x32xf32> to vector<8x32xf32>
    %2 = arith.truncf %1 : vector<8x32xf32> to vector<8x32xbf16>
    %c0_2 = arith.constant 0 : index
    %c0_3 = arith.constant 0 : index
    %3 = vector.load %arg2[%c0_2, %c0_3] : memref<32x128xbf16, #tpu.memory_space<vmem>>, vector<32x128xbf16>
    %cst = arith.constant dense<0.000000e+00> : vector<8x128xf32>
    %4 = tpu.matmul %2, %3, %cst {dimension_numbers = #tpu.dot_dimension_numbers<[1], [0], [0], [1], [0, 0, 1, 1], [], []>} : vector<8x32xbf16>, vector<32x128xbf16>, vector<8x128xf32> -> vector<8x128xf32>
    %c0_4 = arith.constant 0 : index
    %c0_5 = arith.constant 0 : index
    %5 = vector.load %arg3[%c0_4, %c0_5] : memref<1x128xf32, #tpu.memory_space<vmem>>, vector<1x128xf32>
    %6 = vector.broadcast %5 : vector<1x128xf32> to vector<8x128xf32>
    %7 = arith.addf %4, %6 : vector<8x128xf32>
    %c0_6 = arith.constant 0 : index
    %c0_7 = arith.constant 0 : index
    %8 = vector.load %arg4[%c0_6, %c0_7] : memref<8x128xf32, #tpu.memory_space<vmem>>, vector<8x128xf32>
    %9 = arith.addf %7, %8 : vector<8x128xf32>
    %c0_8 = arith.constant 0 : index
    %c0_9 = arith.constant 0 : index
    %c0_10 = arith.constant 0 : index
    %10 = vector.load %arg5[%c0_8, %c0_9, %c0_10] : memref<1x8x128xf32, #tpu.memory_space<vmem>>, vector<1x8x128xf32>
    %11 = vector.shape_cast %10 : vector<1x8x128xf32> to vector<8x128xf32>
    %12 = vector.shape_cast %9 : vector<8x128xf32> to vector<1x8x128xf32>
    tpu.vector_store %arg5[%c0_8, %c0_9, %c0_10], %12 {strides = array<i32>} : memref<1x8x128xf32, #tpu.memory_space<vmem>>, vector<1x8x128xf32>,
    return
  }
  func.func @transform_0(%arg0: i32) -> (i32, i32, i32) {
    %c0_i32 = arith.constant 0 : i32
    %c0_i32_0 = arith.constant 0 : i32
    %c0_i32_1 = arith.constant 0 : i32
    return %arg0, %c0_i32, %c0_i32_0 : i32, i32, i32
  }
  func.func @transform_1(%arg0: i32) -> (i32, i32) {
    %c0_i32 = arith.constant 0 : i32
    %c0_i32_0 = arith.constant 0 : i32
    %c0_i32_1 = arith.constant 0 : i32
    return %c0_i32, %c0_i32_0 : i32, i32
  }
  func.func @transform_2(%arg0: i32) -> (i32, i32) {
    %c0_i32 = arith.constant 0 : i32
    %c0_i32_0 = arith.constant 0 : i32
    %c0_i32_1 = arith.constant 0 : i32
    return %c0_i32, %c0_i32_0 : i32, i32
  }
  func.func @transform_3(%arg0: i32) -> (i32, i32) {
    %c0_i32 = arith.constant 0 : i32
    %c0_i32_0 = arith.constant 0 : i32
    %c0_i32_1 = arith.constant 0 : i32
    return %c0_i32, %c0_i32_0 : i32, i32
  }
  func.func @transform_4(%arg0: i32) -> (i32, i32, i32) {
    %c0_i32 = arith.constant 0 : i32
    %c0_i32_0 = arith.constant 0 : i32
    %c0_i32_1 = arith.constant 0 : i32
    return %arg0, %c0_i32, %c0_i32_0 : i32, i32, i32
  }
}

module attributes {stable_mosaic.version = 11 : i64} {
  func.func @_block_kernel(%arg0: i32, %arg1: memref<1x8x128xf32, #tpu.memory_space<vmem>>, %arg2: memref<1x8x128xf32, #tpu.memory_space<vmem>>, %arg3: memref<128x128xbf16, #tpu.memory_space<vmem>>, %arg4: memref<128x256xbf16, #tpu.memory_space<vmem>>, %arg5: memref<1x256xf32, #tpu.memory_space<vmem>>, %arg6: memref<128x128xbf16, #tpu.memory_space<vmem>>, %arg7: memref<128x128xbf16, #tpu.memory_space<vmem>>, %arg8: memref<1x128xf32, #tpu.memory_space<vmem>>, %arg9: memref<128x128xbf16, #tpu.memory_space<vmem>>, %arg10: memref<16x128xf32, #tpu.memory_space<vmem>>, %arg11: memref<1x8x128xf32, #tpu.memory_space<vmem>>) attributes {dimension_semantics = [#tpu.dimension_semantics<parallel>], iteration_bounds = array<i64: 2>, scalar_prefetch = 0 : i64, scratch_operands = 0 : i64, tpu.core_type = #tpu.core_type<tc>, window_params = [{transform_indices = @transform_0, window_bounds = array<i64: 1, 8, 128>}, {transform_indices = @transform_1, window_bounds = array<i64: 1, 8, 128>}, {pipeline_mode = #tpu.pipeline_mode<synchronous>, transform_indices = @transform_2, window_bounds = array<i64: 128, 128>}, {pipeline_mode = #tpu.pipeline_mode<synchronous>, transform_indices = @transform_3, window_bounds = array<i64: 128, 256>}, {pipeline_mode = #tpu.pipeline_mode<synchronous>, transform_indices = @transform_4, window_bounds = array<i64: 1, 256>}, {pipeline_mode = #tpu.pipeline_mode<synchronous>, transform_indices = @transform_5, window_bounds = array<i64: 128, 128>}, {pipeline_mode = #tpu.pipeline_mode<synchronous>, transform_indices = @transform_6, window_bounds = array<i64: 128, 128>}, {pipeline_mode = #tpu.pipeline_mode<synchronous>, transform_indices = @transform_7, window_bounds = array<i64: 1, 128>}, {pipeline_mode = #tpu.pipeline_mode<synchronous>, transform_indices = @transform_8, window_bounds = array<i64: 128, 128>}, {pipeline_mode = #tpu.pipeline_mode<synchronous>, transform_indices = @transform_9, window_bounds = array<i64: 16, 128>}, {transform_indices = @transform_10, window_bounds = array<i64: 1, 8, 128>}]} {
    %c0 = arith.constant 0 : index
    %c0_0 = arith.constant 0 : index
    %c0_1 = arith.constant 0 : index
    %0 = vector.load %arg1[%c0, %c0_0, %c0_1] : memref<1x8x128xf32, #tpu.memory_space<vmem>>, vector<1x8x128xf32>
    %1 = vector.shape_cast %0 : vector<1x8x128xf32> to vector<8x128xf32>
    %c0_2 = arith.constant 0 : index
    %c0_3 = arith.constant 0 : index
    %c0_4 = arith.constant 0 : index
    %2 = vector.load %arg2[%c0_2, %c0_3, %c0_4] : memref<1x8x128xf32, #tpu.memory_space<vmem>>, vector<1x8x128xf32>
    %3 = vector.shape_cast %2 : vector<1x8x128xf32> to vector<8x128xf32>
    %c0_5 = arith.constant 0 : index
    %c0_6 = arith.constant 0 : index
    %4 = vector.load %arg10[%c0_5, %c0_6] : memref<16x128xf32, #tpu.memory_space<vmem>>, vector<1x128xf32>
    %c1 = arith.constant 1 : index
    %c0_7 = arith.constant 0 : index
    %5 = vector.load %arg10[%c1, %c0_7] : memref<16x128xf32, #tpu.memory_space<vmem>>, vector<1x128xf32>
    %c2 = arith.constant 2 : index
    %c0_8 = arith.constant 0 : index
    %6 = vector.load %arg10[%c2, %c0_8] : memref<16x128xf32, #tpu.memory_space<vmem>>, vector<1x128xf32>
    %c3 = arith.constant 3 : index
    %c0_9 = arith.constant 0 : index
    %7 = vector.load %arg10[%c3, %c0_9] : memref<16x128xf32, #tpu.memory_space<vmem>>, vector<1x128xf32>
    %c4 = arith.constant 4 : index
    %c0_10 = arith.constant 0 : index
    %8 = vector.load %arg10[%c4, %c0_10] : memref<16x128xf32, #tpu.memory_space<vmem>>, vector<1x128xf32>
    %c5 = arith.constant 5 : index
    %c0_11 = arith.constant 0 : index
    %9 = vector.load %arg10[%c5, %c0_11] : memref<16x128xf32, #tpu.memory_space<vmem>>, vector<1x128xf32>
    %c6 = arith.constant 6 : index
    %c0_12 = arith.constant 0 : index
    %10 = vector.load %arg10[%c6, %c0_12] : memref<16x128xf32, #tpu.memory_space<vmem>>, vector<1x128xf32>
    %c7 = arith.constant 7 : index
    %c0_13 = arith.constant 0 : index
    %11 = vector.load %arg10[%c7, %c0_13] : memref<16x128xf32, #tpu.memory_space<vmem>>, vector<1x128xf32>
    %c8 = arith.constant 8 : index
    %c0_14 = arith.constant 0 : index
    %12 = vector.load %arg10[%c8, %c0_14] : memref<16x128xf32, #tpu.memory_space<vmem>>, vector<1x1xf32>
    %c9 = arith.constant 9 : index
    %c0_15 = arith.constant 0 : index
    %13 = vector.load %arg10[%c9, %c0_15] : memref<16x128xf32, #tpu.memory_space<vmem>>, vector<1x1xf32>
    %c0_16 = arith.constant 0 : index
    %c0_17 = arith.constant 0 : index
    %14 = vector.load %arg3[%c0_16, %c0_17] : memref<128x128xbf16, #tpu.memory_space<vmem>>, vector<128x128xbf16>
    %15 = arith.truncf %1 : vector<8x128xf32> to vector<8x128xbf16>
    %cst = arith.constant dense<0.000000e+00> : vector<8x128xf32>
    %16 = tpu.matmul %15, %14, %cst {dimension_numbers = #tpu.dot_dimension_numbers<[1], [0], [0], [1], [0, 0, 1, 1], [], []>} : vector<8x128xbf16>, vector<128x128xbf16>, vector<8x128xf32> -> vector<8x128xf32>
    %17 = vector.broadcast %4 : vector<1x128xf32> to vector<8x128xf32>
    %18 = arith.addf %16, %17 : vector<8x128xf32>
    %c0_18 = arith.constant 0 : index
    %c0_19 = arith.constant 0 : index
    %19 = vector.load %arg4[%c0_18, %c0_19] : memref<128x256xbf16, #tpu.memory_space<vmem>>, vector<128x256xbf16>
    %20 = arith.truncf %3 : vector<8x128xf32> to vector<8x128xbf16>
    %cst_20 = arith.constant dense<0.000000e+00> : vector<8x256xf32>
    %21 = tpu.matmul %20, %19, %cst_20 {dimension_numbers = #tpu.dot_dimension_numbers<[1], [0], [0], [1], [0, 0, 1, 1], [], []>} : vector<8x128xbf16>, vector<128x256xbf16>, vector<8x256xf32> -> vector<8x256xf32>
    %c0_21 = arith.constant 0 : index
    %c0_22 = arith.constant 0 : index
    %22 = vector.load %arg5[%c0_21, %c0_22] : memref<1x256xf32, #tpu.memory_space<vmem>>, vector<1x256xf32>
    %23 = vector.broadcast %22 : vector<1x256xf32> to vector<8x256xf32>
    %24 = arith.addf %21, %23 : vector<8x256xf32>
    %25 = vector.extract_strided_slice %24 {offsets = [0, 0], sizes = [8, 128], strides = [1, 1]} : vector<8x256xf32> to vector<8x128xf32>
    %26 = vector.extract_strided_slice %24 {offsets = [0, 128], sizes = [8, 128], strides = [1, 1]} : vector<8x256xf32> to vector<8x128xf32>
    %27 = vector.extract_strided_slice %18 {offsets = [0, 0], sizes = [8, 32], strides = [1, 1]} : vector<8x128xf32> to vector<8x32xf32>
    %28 = vector.extract_strided_slice %25 {offsets = [0, 0], sizes = [8, 32], strides = [1, 1]} : vector<8x128xf32> to vector<8x32xf32>
    %29 = vector.extract_strided_slice %26 {offsets = [0, 0], sizes = [8, 32], strides = [1, 1]} : vector<8x128xf32> to vector<8x32xf32>
    %30 = arith.truncf %27 : vector<8x32xf32> to vector<8x32xbf16>
    %31 = arith.truncf %28 : vector<8x32xf32> to vector<8x32xbf16>
    %cst_23 = arith.constant dense<0.000000e+00> : vector<8x8xf32>
    %32 = tpu.matmul %30, %31, %cst_23 {dimension_numbers = #tpu.dot_dimension_numbers<[1], [1], [0], [0], [0, 0, 1, 0], [], []>} : vector<8x32xbf16>, vector<8x32xbf16>, vector<8x8xf32> -> vector<8x8xf32>
    %cst_24 = arith.constant dense<0xFF800000> : vector<8xf32>
    %33 = vector.multi_reduction <maximumf>, %32, %cst_24 [1] : vector<8x8xf32> to vector<8xf32>
    %34 = vector.shape_cast %33 : vector<8xf32> to vector<8x1xf32>
    %35 = vector.broadcast %34 : vector<8x1xf32> to vector<8x8xf32>
    %36 = arith.subf %32, %35 : vector<8x8xf32>
    %37 = math.exp %36 : vector<8x8xf32>
    %cst_25 = arith.constant dense<0.000000e+00> : vector<8xf32>
    %38 = vector.multi_reduction <add>, %37, %cst_25 [1] : vector<8x8xf32> to vector<8xf32>
    %39 = vector.shape_cast %38 : vector<8xf32> to vector<8x1xf32>
    %40 = tpu.reciprocal %39 {approx = true} : vector<8x1xf32> -> vector<8x1xf32>
    %41 = vector.broadcast %40 : vector<8x1xf32> to vector<8x8xf32>
    %42 = arith.mulf %37, %41 : vector<8x8xf32>
    %43 = arith.truncf %29 : vector<8x32xf32> to vector<8x32xbf16>
    %44 = arith.truncf %42 : vector<8x8xf32> to vector<8x8xbf16>
    %cst_26 = arith.constant dense<0.000000e+00> : vector<8x32xf32>
    %45 = tpu.matmul %44, %43, %cst_26 {dimension_numbers = #tpu.dot_dimension_numbers<[1], [0], [0], [1], [0, 0, 1, 1], [], []>} : vector<8x8xbf16>, vector<8x32xbf16>, vector<8x32xf32> -> vector<8x32xf32>
    %46 = vector.extract_strided_slice %18 {offsets = [0, 32], sizes = [8, 32], strides = [1, 1]} : vector<8x128xf32> to vector<8x32xf32>
    %47 = vector.extract_strided_slice %25 {offsets = [0, 32], sizes = [8, 32], strides = [1, 1]} : vector<8x128xf32> to vector<8x32xf32>
    %48 = vector.extract_strided_slice %26 {offsets = [0, 32], sizes = [8, 32], strides = [1, 1]} : vector<8x128xf32> to vector<8x32xf32>
    %49 = arith.truncf %46 : vector<8x32xf32> to vector<8x32xbf16>
    %50 = arith.truncf %47 : vector<8x32xf32> to vector<8x32xbf16>
    %cst_27 = arith.constant dense<0.000000e+00> : vector<8x8xf32>
    %51 = tpu.matmul %49, %50, %cst_27 {dimension_numbers = #tpu.dot_dimension_numbers<[1], [1], [0], [0], [0, 0, 1, 0], [], []>} : vector<8x32xbf16>, vector<8x32xbf16>, vector<8x8xf32> -> vector<8x8xf32>
    %cst_28 = arith.constant dense<0xFF800000> : vector<8xf32>
    %52 = vector.multi_reduction <maximumf>, %51, %cst_28 [1] : vector<8x8xf32> to vector<8xf32>
    %53 = vector.shape_cast %52 : vector<8xf32> to vector<8x1xf32>
    %54 = vector.broadcast %53 : vector<8x1xf32> to vector<8x8xf32>
    %55 = arith.subf %51, %54 : vector<8x8xf32>
    %56 = math.exp %55 : vector<8x8xf32>
    %cst_29 = arith.constant dense<0.000000e+00> : vector<8xf32>
    %57 = vector.multi_reduction <add>, %56, %cst_29 [1] : vector<8x8xf32> to vector<8xf32>
    %58 = vector.shape_cast %57 : vector<8xf32> to vector<8x1xf32>
    %59 = tpu.reciprocal %58 {approx = true} : vector<8x1xf32> -> vector<8x1xf32>
    %60 = vector.broadcast %59 : vector<8x1xf32> to vector<8x8xf32>
    %61 = arith.mulf %56, %60 : vector<8x8xf32>
    %62 = arith.truncf %48 : vector<8x32xf32> to vector<8x32xbf16>
    %63 = arith.truncf %61 : vector<8x8xf32> to vector<8x8xbf16>
    %cst_30 = arith.constant dense<0.000000e+00> : vector<8x32xf32>
    %64 = tpu.matmul %63, %62, %cst_30 {dimension_numbers = #tpu.dot_dimension_numbers<[1], [0], [0], [1], [0, 0, 1, 1], [], []>} : vector<8x8xbf16>, vector<8x32xbf16>, vector<8x32xf32> -> vector<8x32xf32>
    %65 = vector.extract_strided_slice %18 {offsets = [0, 64], sizes = [8, 32], strides = [1, 1]} : vector<8x128xf32> to vector<8x32xf32>
    %66 = vector.extract_strided_slice %25 {offsets = [0, 64], sizes = [8, 32], strides = [1, 1]} : vector<8x128xf32> to vector<8x32xf32>
    %67 = vector.extract_strided_slice %26 {offsets = [0, 64], sizes = [8, 32], strides = [1, 1]} : vector<8x128xf32> to vector<8x32xf32>
    %68 = arith.truncf %65 : vector<8x32xf32> to vector<8x32xbf16>
    %69 = arith.truncf %66 : vector<8x32xf32> to vector<8x32xbf16>
    %cst_31 = arith.constant dense<0.000000e+00> : vector<8x8xf32>
    %70 = tpu.matmul %68, %69, %cst_31 {dimension_numbers = #tpu.dot_dimension_numbers<[1], [1], [0], [0], [0, 0, 1, 0], [], []>} : vector<8x32xbf16>, vector<8x32xbf16>, vector<8x8xf32> -> vector<8x8xf32>
    %cst_32 = arith.constant dense<0xFF800000> : vector<8xf32>
    %71 = vector.multi_reduction <maximumf>, %70, %cst_32 [1] : vector<8x8xf32> to vector<8xf32>
    %72 = vector.shape_cast %71 : vector<8xf32> to vector<8x1xf32>
    %73 = vector.broadcast %72 : vector<8x1xf32> to vector<8x8xf32>
    %74 = arith.subf %70, %73 : vector<8x8xf32>
    %75 = math.exp %74 : vector<8x8xf32>
    %cst_33 = arith.constant dense<0.000000e+00> : vector<8xf32>
    %76 = vector.multi_reduction <add>, %75, %cst_33 [1] : vector<8x8xf32> to vector<8xf32>
    %77 = vector.shape_cast %76 : vector<8xf32> to vector<8x1xf32>
    %78 = tpu.reciprocal %77 {approx = true} : vector<8x1xf32> -> vector<8x1xf32>
    %79 = vector.broadcast %78 : vector<8x1xf32> to vector<8x8xf32>
    %80 = arith.mulf %75, %79 : vector<8x8xf32>
    %81 = arith.truncf %67 : vector<8x32xf32> to vector<8x32xbf16>
    %82 = arith.truncf %80 : vector<8x8xf32> to vector<8x8xbf16>
    %cst_34 = arith.constant dense<0.000000e+00> : vector<8x32xf32>
    %83 = tpu.matmul %82, %81, %cst_34 {dimension_numbers = #tpu.dot_dimension_numbers<[1], [0], [0], [1], [0, 0, 1, 1], [], []>} : vector<8x8xbf16>, vector<8x32xbf16>, vector<8x32xf32> -> vector<8x32xf32>
    %84 = vector.extract_strided_slice %18 {offsets = [0, 96], sizes = [8, 32], strides = [1, 1]} : vector<8x128xf32> to vector<8x32xf32>
    %85 = vector.extract_strided_slice %25 {offsets = [0, 96], sizes = [8, 32], strides = [1, 1]} : vector<8x128xf32> to vector<8x32xf32>
    %86 = vector.extract_strided_slice %26 {offsets = [0, 96], sizes = [8, 32], strides = [1, 1]} : vector<8x128xf32> to vector<8x32xf32>
    %87 = arith.truncf %84 : vector<8x32xf32> to vector<8x32xbf16>
    %88 = arith.truncf %85 : vector<8x32xf32> to vector<8x32xbf16>
    %cst_35 = arith.constant dense<0.000000e+00> : vector<8x8xf32>
    %89 = tpu.matmul %87, %88, %cst_35 {dimension_numbers = #tpu.dot_dimension_numbers<[1], [1], [0], [0], [0, 0, 1, 0], [], []>} : vector<8x32xbf16>, vector<8x32xbf16>, vector<8x8xf32> -> vector<8x8xf32>
    %cst_36 = arith.constant dense<0xFF800000> : vector<8xf32>
    %90 = vector.multi_reduction <maximumf>, %89, %cst_36 [1] : vector<8x8xf32> to vector<8xf32>
    %91 = vector.shape_cast %90 : vector<8xf32> to vector<8x1xf32>
    %92 = vector.broadcast %91 : vector<8x1xf32> to vector<8x8xf32>
    %93 = arith.subf %89, %92 : vector<8x8xf32>
    %94 = math.exp %93 : vector<8x8xf32>
    %cst_37 = arith.constant dense<0.000000e+00> : vector<8xf32>
    %95 = vector.multi_reduction <add>, %94, %cst_37 [1] : vector<8x8xf32> to vector<8xf32>
    %96 = vector.shape_cast %95 : vector<8xf32> to vector<8x1xf32>
    %97 = tpu.reciprocal %96 {approx = true} : vector<8x1xf32> -> vector<8x1xf32>
    %98 = vector.broadcast %97 : vector<8x1xf32> to vector<8x8xf32>
    %99 = arith.mulf %94, %98 : vector<8x8xf32>
    %100 = arith.truncf %86 : vector<8x32xf32> to vector<8x32xbf16>
    %101 = arith.truncf %99 : vector<8x8xf32> to vector<8x8xbf16>
    %cst_38 = arith.constant dense<0.000000e+00> : vector<8x32xf32>
    %102 = tpu.matmul %101, %100, %cst_38 {dimension_numbers = #tpu.dot_dimension_numbers<[1], [0], [0], [1], [0, 0, 1, 1], [], []>} : vector<8x8xbf16>, vector<8x32xbf16>, vector<8x32xf32> -> vector<8x32xf32>
    %103 = tpu.concatenate %45, %64, %83, %102 in 1 : vector<8x32xf32>, vector<8x32xf32>, vector<8x32xf32>, vector<8x32xf32> -> vector<8x128xf32>
    %c0_39 = arith.constant 0 : index
    %c0_40 = arith.constant 0 : index
    %104 = vector.load %arg6[%c0_39, %c0_40] : memref<128x128xbf16, #tpu.memory_space<vmem>>, vector<128x128xbf16>
    %105 = arith.truncf %103 : vector<8x128xf32> to vector<8x128xbf16>
    %cst_41 = arith.constant dense<0.000000e+00> : vector<8x128xf32>
    %106 = tpu.matmul %105, %104, %cst_41 {dimension_numbers = #tpu.dot_dimension_numbers<[1], [0], [0], [1], [0, 0, 1, 1], [], []>} : vector<8x128xbf16>, vector<128x128xbf16>, vector<8x128xf32> -> vector<8x128xf32>
    %107 = vector.broadcast %5 : vector<1x128xf32> to vector<8x128xf32>
    %108 = arith.addf %106, %107 : vector<8x128xf32>
    %109 = vector.broadcast %12 : vector<1x1xf32> to vector<8x128xf32>
    %110 = arith.mulf %109, %108 : vector<8x128xf32>
    %111 = arith.addf %1, %110 : vector<8x128xf32>
    %cst_42 = arith.constant dense<0.000000e+00> : vector<8xf32>
    %112 = vector.multi_reduction <add>, %111, %cst_42 [1] : vector<8x128xf32> to vector<8xf32>
    %113 = vector.shape_cast %112 : vector<8xf32> to vector<8x1xf32>
    %cst_43 = arith.constant 0.020833334 : f32
    %114 = vector.broadcast %cst_43 : f32 to vector<8x1xf32>
    %115 = arith.mulf %113, %114 : vector<8x1xf32>
    %116 = vector.broadcast %115 : vector<8x1xf32> to vector<8x128xf32>
    %117 = arith.subf %111, %116 : vector<8x128xf32>
    %118 = vector.broadcast %11 : vector<1x128xf32> to vector<8x128xf32>
    %119 = arith.mulf %117, %118 : vector<8x128xf32>
    %120 = arith.mulf %119, %119 : vector<8x128xf32>
    %cst_44 = arith.constant dense<0.000000e+00> : vector<8xf32>
    %121 = vector.multi_reduction <add>, %120, %cst_44 [1] : vector<8x128xf32> to vector<8xf32>
    %122 = vector.shape_cast %121 : vector<8xf32> to vector<8x1xf32>
    %cst_45 = arith.constant 0.020833334 : f32
    %123 = vector.broadcast %cst_45 : f32 to vector<8x1xf32>
    %124 = arith.mulf %122, %123 : vector<8x1xf32>
    %cst_46 = arith.constant 9.99999974E-6 : f32
    %125 = vector.broadcast %cst_46 : f32 to vector<8x1xf32>
    %126 = arith.addf %124, %125 : vector<8x1xf32>
    %127 = math.rsqrt %126 : vector<8x1xf32>
    %128 = vector.broadcast %127 : vector<8x1xf32> to vector<8x128xf32>
    %129 = arith.mulf %119, %128 : vector<8x128xf32>
    %130 = vector.broadcast %7 : vector<1x128xf32> to vector<8x128xf32>
    %131 = arith.mulf %129, %130 : vector<8x128xf32>
    %132 = vector.broadcast %8 : vector<1x128xf32> to vector<8x128xf32>
    %133 = arith.addf %131, %132 : vector<8x128xf32>
    %c0_47 = arith.constant 0 : index
    %c0_48 = arith.constant 0 : index
    %134 = vector.load %arg7[%c0_47, %c0_48] : memref<128x128xbf16, #tpu.memory_space<vmem>>, vector<128x128xbf16>
    %135 = arith.truncf %133 : vector<8x128xf32> to vector<8x128xbf16>
    %cst_49 = arith.constant dense<0.000000e+00> : vector<8x128xf32>
    %136 = tpu.matmul %135, %134, %cst_49 {dimension_numbers = #tpu.dot_dimension_numbers<[1], [0], [0], [1], [0, 0, 1, 1], [], []>} : vector<8x128xbf16>, vector<128x128xbf16>, vector<8x128xf32> -> vector<8x128xf32>
    %c0_50 = arith.constant 0 : index
    %c0_51 = arith.constant 0 : index
    %137 = vector.load %arg8[%c0_50, %c0_51] : memref<1x128xf32, #tpu.memory_space<vmem>>, vector<1x128xf32>
    %138 = vector.broadcast %137 : vector<1x128xf32> to vector<8x128xf32>
    %139 = arith.addf %136, %138 : vector<8x128xf32>
    %140 = arith.mulf %139, %139 : vector<8x128xf32>
    %141 = arith.mulf %139, %140 : vector<8x128xf32>
    %cst_52 = arith.constant 4.471500e-02 : f32
    %142 = vector.broadcast %cst_52 : f32 to vector<8x128xf32>
    %143 = arith.mulf %142, %141 : vector<8x128xf32>
    %144 = arith.addf %139, %143 : vector<8x128xf32>
    %cst_53 = arith.constant 0.797884583 : f32
    %145 = vector.broadcast %cst_53 : f32 to vector<8x128xf32>
    %146 = arith.mulf %145, %144 : vector<8x128xf32>
    %147 = math.tanh %146 : vector<8x128xf32>
    %cst_54 = arith.constant 1.000000e+00 : f32
    %148 = vector.broadcast %cst_54 : f32 to vector<8x128xf32>
    %149 = arith.addf %148, %147 : vector<8x128xf32>
    %cst_55 = arith.constant 5.000000e-01 : f32
    %150 = vector.broadcast %cst_55 : f32 to vector<8x128xf32>
    %151 = arith.mulf %150, %149 : vector<8x128xf32>
    %152 = arith.mulf %139, %151 : vector<8x128xf32>
    %c0_56 = arith.constant 0 : index
    %c0_57 = arith.constant 0 : index
    %153 = vector.load %arg9[%c0_56, %c0_57] : memref<128x128xbf16, #tpu.memory_space<vmem>>, vector<128x128xbf16>
    %154 = arith.truncf %152 : vector<8x128xf32> to vector<8x128xbf16>
    %cst_58 = arith.constant dense<0.000000e+00> : vector<8x128xf32>
    %155 = tpu.matmul %154, %153, %cst_58 {dimension_numbers = #tpu.dot_dimension_numbers<[1], [0], [0], [1], [0, 0, 1, 1], [], []>} : vector<8x128xbf16>, vector<128x128xbf16>, vector<8x128xf32> -> vector<8x128xf32>
    %156 = vector.broadcast %6 : vector<1x128xf32> to vector<8x128xf32>
    %157 = arith.addf %155, %156 : vector<8x128xf32>
    %158 = vector.broadcast %13 : vector<1x1xf32> to vector<8x128xf32>
    %159 = arith.mulf %158, %157 : vector<8x128xf32>
    %160 = arith.addf %133, %159 : vector<8x128xf32>
    %cst_59 = arith.constant dense<0.000000e+00> : vector<8xf32>
    %161 = vector.multi_reduction <add>, %160, %cst_59 [1] : vector<8x128xf32> to vector<8xf32>
    %162 = vector.shape_cast %161 : vector<8xf32> to vector<8x1xf32>
    %cst_60 = arith.constant 0.020833334 : f32
    %163 = vector.broadcast %cst_60 : f32 to vector<8x1xf32>
    %164 = arith.mulf %162, %163 : vector<8x1xf32>
    %165 = vector.broadcast %164 : vector<8x1xf32> to vector<8x128xf32>
    %166 = arith.subf %160, %165 : vector<8x128xf32>
    %167 = vector.broadcast %11 : vector<1x128xf32> to vector<8x128xf32>
    %168 = arith.mulf %166, %167 : vector<8x128xf32>
    %169 = arith.mulf %168, %168 : vector<8x128xf32>
    %cst_61 = arith.constant dense<0.000000e+00> : vector<8xf32>
    %170 = vector.multi_reduction <add>, %169, %cst_61 [1] : vector<8x128xf32> to vector<8xf32>
    %171 = vector.shape_cast %170 : vector<8xf32> to vector<8x1xf32>
    %cst_62 = arith.constant 0.020833334 : f32
    %172 = vector.broadcast %cst_62 : f32 to vector<8x1xf32>
    %173 = arith.mulf %171, %172 : vector<8x1xf32>
    %cst_63 = arith.constant 9.99999974E-6 : f32
    %174 = vector.broadcast %cst_63 : f32 to vector<8x1xf32>
    %175 = arith.addf %173, %174 : vector<8x1xf32>
    %176 = math.rsqrt %175 : vector<8x1xf32>
    %177 = vector.broadcast %176 : vector<8x1xf32> to vector<8x128xf32>
    %178 = arith.mulf %168, %177 : vector<8x128xf32>
    %179 = vector.broadcast %9 : vector<1x128xf32> to vector<8x128xf32>
    %180 = arith.mulf %178, %179 : vector<8x128xf32>
    %181 = vector.broadcast %10 : vector<1x128xf32> to vector<8x128xf32>
    %182 = arith.addf %180, %181 : vector<8x128xf32>
    %c0_64 = arith.constant 0 : index
    %c0_65 = arith.constant 0 : index
    %c0_66 = arith.constant 0 : index
    %183 = vector.load %arg11[%c0_64, %c0_65, %c0_66] : memref<1x8x128xf32, #tpu.memory_space<vmem>>, vector<1x8x128xf32>
    %184 = vector.shape_cast %183 : vector<1x8x128xf32> to vector<8x128xf32>
    %185 = vector.shape_cast %182 : vector<8x128xf32> to vector<1x8x128xf32>
    tpu.vector_store %arg11[%c0_64, %c0_65, %c0_66], %185 {strides = array<i32>} : memref<1x8x128xf32, #tpu.memory_space<vmem>>, vector<1x8x128xf32>,
    return
  }
  func.func @transform_0(%arg0: i32) -> (i32, i32, i32) {
    %c0_i32 = arith.constant 0 : i32
    %c0_i32_0 = arith.constant 0 : i32
    %c0_i32_1 = arith.constant 0 : i32
    return %arg0, %c0_i32, %c0_i32_0 : i32, i32, i32
  }
  func.func @transform_1(%arg0: i32) -> (i32, i32, i32) {
    %c0_i32 = arith.constant 0 : i32
    %c0_i32_0 = arith.constant 0 : i32
    %c0_i32_1 = arith.constant 0 : i32
    return %arg0, %c0_i32, %c0_i32_0 : i32, i32, i32
  }
  func.func @transform_2(%arg0: i32) -> (i32, i32) {
    %c0_i32 = arith.constant 0 : i32
    %c0_i32_0 = arith.constant 0 : i32
    %c0_i32_1 = arith.constant 0 : i32
    return %c0_i32, %c0_i32_0 : i32, i32
  }
  func.func @transform_3(%arg0: i32) -> (i32, i32) {
    %c0_i32 = arith.constant 0 : i32
    %c0_i32_0 = arith.constant 0 : i32
    %c0_i32_1 = arith.constant 0 : i32
    return %c0_i32, %c0_i32_0 : i32, i32
  }
  func.func @transform_4(%arg0: i32) -> (i32, i32) {
    %c0_i32 = arith.constant 0 : i32
    %c0_i32_0 = arith.constant 0 : i32
    %c0_i32_1 = arith.constant 0 : i32
    return %c0_i32, %c0_i32_0 : i32, i32
  }
  func.func @transform_5(%arg0: i32) -> (i32, i32) {
    %c0_i32 = arith.constant 0 : i32
    %c0_i32_0 = arith.constant 0 : i32
    %c0_i32_1 = arith.constant 0 : i32
    return %c0_i32, %c0_i32_0 : i32, i32
  }
  func.func @transform_6(%arg0: i32) -> (i32, i32) {
    %c0_i32 = arith.constant 0 : i32
    %c0_i32_0 = arith.constant 0 : i32
    %c0_i32_1 = arith.constant 0 : i32
    return %c0_i32, %c0_i32_0 : i32, i32
  }
  func.func @transform_7(%arg0: i32) -> (i32, i32) {
    %c0_i32 = arith.constant 0 : i32
    %c0_i32_0 = arith.constant 0 : i32
    %c0_i32_1 = arith.constant 0 : i32
    return %c0_i32, %c0_i32_0 : i32, i32
  }
  func.func @transform_8(%arg0: i32) -> (i32, i32) {
    %c0_i32 = arith.constant 0 : i32
    %c0_i32_0 = arith.constant 0 : i32
    %c0_i32_1 = arith.constant 0 : i32
    return %c0_i32, %c0_i32_0 : i32, i32
  }
  func.func @transform_9(%arg0: i32) -> (i32, i32) {
    %c0_i32 = arith.constant 0 : i32
    %c0_i32_0 = arith.constant 0 : i32
    %c0_i32_1 = arith.constant 0 : i32
    return %c0_i32, %c0_i32_0 : i32, i32
  }
  func.func @transform_10(%arg0: i32) -> (i32, i32, i32) {
    %c0_i32 = arith.constant 0 : i32
    %c0_i32_0 = arith.constant 0 : i32
    %c0_i32_1 = arith.constant 0 : i32
    return %arg0, %c0_i32, %c0_i32_0 : i32, i32, i32
  }
}

</mosaic_0001>

<llo_original>
// kernel: layer_forward.7
$region0: #{layer_forward.7}
  #allocation0 [shape = 'u32[]', space=smem, size = 0x4, offset = 0x4, fixed_abs, tag = 'smem constant byte address 0x4 - core index']
  #allocation1 [shape = 'u32[144,128]{1,0:T(1,128)}', space=vmem, size = 0x12000, scoped, tag = 'internal scratch']
  %s0 = inlined_call_operand.vmem [shape: f32[2,8,32], index: 0, kind: input, shape index: {}]
  %s1 = inlined_call_operand.vmem [shape: bf16[32,128], index: 1, kind: input, shape index: {}]
  %s2 = inlined_call_operand.vmem [shape: f32[1,128], index: 2, kind: input, shape index: {}]
  %s3 = inlined_call_operand.vmem [shape: f32[8,128], index: 3, kind: input, shape index: {}]
  %s4 = inlined_call_operand.vmem [shape: f32[2,8,128], index: 4, kind: output, shape index: {}]
  %s5 = sld [smem:[#allocation0]]
  $region49: #{layer_forward.7} parent=0
    _
  %s7 = ssub.s32 1, %s5
  %s8 = scalar_select 0, %s7, %s5
  loop: start=0, step=1, limit=4
  $region2: #{layer_forward.7} parent=0 // loop_pre_header
    _
  $region3: #{layer_forward.7} parent=0 // loop_header
    %s10 = sphi 0, %s14
    %p11 = scmp.ge.s32.totalorder %s10, 4
    %s20 = sphi 0, %s22
    %s23 = sphi 0, %s20
    %s24 = sphi 0, %s23
    %s40 = sphi 0, %s24
    %s44 = sphi 0, %s44
    %s46 = sphi 0, %s44
    %s47 = sphi 0, %s46
    %s61 = sphi 0, %s47
    %s65 = sphi 0, %s65
    %s67 = sphi 0, %s65
    %s68 = sphi 0, %s67
    %s82 = sphi 0, %s68
    %s86 = sphi 0, %s86
    %s88 = sphi 0, %s86
    %s89 = sphi 0, %s88
    %s103 = sphi 0, %s89
    %s109 = sphi 0, %s111
    %s112 = sphi 0, %s109
    %s113 = sphi 0, %s112
    %s129 = sphi 0, %s113
  $region4: #{layer_forward.7} parent=0 // loop_header_branch
    %13 = sbr.rel (%p11) target = $region8
  $region5: #{layer_forward.7} parent=0 // loop_body
    %s15 = ssub.s32 %s10, 1
    %s16 = ssub.s32 %s10, 2
    %s17 = sadd.s32 %s10, 1
    %s18 = ssub.s32 %s10, %s17
    %p19 = scmp.eq.s32.totalorder %s18, 0
    %s21 = sadd.s32 %s20, 1
    %s22 = scalar_select %p19, %s20, %s21
    %p25 = pneg %p19
    %p26 = scmp.eq.s32.totalorder %s10, 1
    %p27 = por %p25, %p26
    %p28 = scmp.ne.s32.totalorder %s20, %s23
    %p29 = scmp.eq.s32.totalorder %s10, 0
    %p30 = por %p28, %p29
    %p31 = scmp.ne.s32.totalorder %s20, %s23
    %p32 = scmp.eq.s32.totalorder %s15, 1
    %p33 = por %p31, %p32
    %p34 = scmp.ne.s32.totalorder %s23, %s24
    %p35 = scmp.eq.s32.totalorder %s15, 0
    %p36 = por %p34, %p35
    %p37 = scmp.ne.s32.totalorder %s23, %s24
    %p38 = scmp.eq.s32.totalorder %s16, 1
    %p39 = por %p37, %p38
    %p41 = scmp.ne.s32.totalorder %s24, %s40
    %p42 = scmp.eq.s32.totalorder %s16, 0
    %p43 = por %p41, %p42
    %s45 = sadd.s32 %s44, 1
    %p48 = scmp.eq.s32.totalorder %s10, 1
    %p49 = scmp.ne.s32.totalorder %s44, %s46
    %p50 = scmp.eq.s32.totalorder %s10, 0
    %p51 = por %p49, %p50
    %p52 = scmp.ne.s32.totalorder %s44, %s46
    %p53 = scmp.eq.s32.totalorder %s15, 1
    %p54 = por %p52, %p53
    %p55 = scmp.ne.s32.totalorder %s46, %s47
    %p56 = scmp.eq.s32.totalorder %s15, 0
    %p57 = por %p55, %p56
    %p58 = scmp.ne.s32.totalorder %s46, %s47
    %p59 = scmp.eq.s32.totalorder %s16, 1
    %p60 = por %p58, %p59
    %p62 = scmp.ne.s32.totalorder %s47, %s61
    %p63 = scmp.eq.s32.totalorder %s16, 0
    %p64 = por %p62, %p63
    %s66 = sadd.s32 %s65, 1
    %p69 = scmp.eq.s32.totalorder %s10, 1
    %p70 = scmp.ne.s32.totalorder %s65, %s67
    %p71 = scmp.eq.s32.totalorder %s10, 0
    %p72 = por %p70, %p71
    %p73 = scmp.ne.s32.totalorder %s65, %s67
    %p74 = scmp.eq.s32.totalorder %s15, 1
    %p75 = por %p73, %p74
    %p76 = scmp.ne.s32.totalorder %s67, %s68
    %p77 = scmp.eq.s32.totalorder %s15, 0
    %p78 = por %p76, %p77
    %p79 = scmp.ne.s32.totalorder %s67, %s68
    %p80 = scmp.eq.s32.totalorder %s16, 1
    %p81 = por %p79, %p80
    %p83 = scmp.ne.s32.totalorder %s68, %s82
    %p84 = scmp.eq.s32.totalorder %s16, 0
    %p85 = por %p83, %p84
    %s87 = sadd.s32 %s86, 1
    %p90 = scmp.eq.s32.totalorder %s10, 1
    %p91 = scmp.ne.s32.totalorder %s86, %s88
    %p92 = scmp.eq.s32.totalorder %s10, 0
    %p93 = por %p91, %p92
    %p94 = scmp.ne.s32.totalorder %s86, %s88
    %p95 = scmp.eq.s32.totalorder %s15, 1
    %p96 = por %p94, %p95
    %p97 = scmp.ne.s32.totalorder %s88, %s89
    %p98 = scmp.eq.s32.totalorder %s15, 0
    %p99 = por %p97, %p98
    %p100 = scmp.ne.s32.totalorder %s88, %s89
    %p101 = scmp.eq.s32.totalorder %s16, 1
    %p102 = por %p100, %p101
    %p104 = scmp.ne.s32.totalorder %s89, %s103
    %p105 = scmp.eq.s32.totalorder %s16, 0
    %p106 = por %p104, %p105
    %s107 = ssub.s32 %s10, %s17
    %p108 = scmp.eq.s32.totalorder %s107, 0
    %s110 = sadd.s32 %s109, 1
    %s111 = scalar_select %p108, %s109, %s110
    %p114 = pneg %p108
    %p115 = scmp.eq.s32.totalorder %s10, 1
    %p116 = por %p114, %p115
    %p117 = scmp.ne.s32.totalorder %s109, %s112
    %p118 = scmp.eq.s32.totalorder %s10, 0
    %p119 = por %p117, %p118
    %p120 = scmp.ne.s32.totalorder %s109, %s112
    %p121 = scmp.eq.s32.totalorder %s15, 1
    %p122 = por %p120, %p121
    %p123 = scmp.ne.s32.totalorder %s112, %s113
    %p124 = scmp.eq.s32.totalorder %s15, 0
    %p125 = por %p123, %p124
    %p126 = scmp.ne.s32.totalorder %s112, %s113
    %p127 = scmp.eq.s32.totalorder %s16, 1
    %p128 = por %p126, %p127
    %p130 = scmp.ne.s32.totalorder %s113, %s129
    %p131 = scmp.eq.s32.totalorder %s16, 0
    %p132 = por %p130, %p131
    %p133 = scmp.le.s32.totalorder 1, %s10
    %p134 = scmp.lt.s32.totalorder %s10, 3
    %p135 = pnand %p133, %p134
    %p136 = pneg %p135
    // Predicated region
    $region9: #{layer_forward.7} parent=5 // pred_check
      _
    $region10: #{layer_forward.7} parent=5 // pred_check_branch
      %138 = sbr.rel (%p135) target = $region12
    $region11: #{layer_forward.7} parent=5 // pred_region
      %s139 = ssub.s32 %s10, 1
      // Predicated region
      $region13: #{layer_forward.7} parent=11 // pred_check
        %p140 = pneg %p57
      $region14: #{layer_forward.7} parent=11 // pred_check_branch
        %142 = sbr.rel (%p140) target = $region16
      $region15: #{layer_forward.7} parent=11 // pred_region
        _
      $region16: #{layer_forward.7} parent=11 // pred_fallthru
        _
      // Predicated region
      $region17: #{layer_forward.7} parent=11 // pred_check
        %p143 = pneg %p78
      $region18: #{layer_forward.7} parent=11 // pred_check_branch
        %145 = sbr.rel (%p143) target = $region20
      $region19: #{layer_forward.7} parent=11 // pred_region
        _
      $region20: #{layer_forward.7} parent=11 // pred_fallthru
        _
      // Predicated region
      $region21: #{layer_forward.7} parent=11 // pred_check
        %p146 = pneg %p99
      $region22: #{layer_forward.7} parent=11 // pred_check_branch
        %148 = sbr.rel (%p146) target = $region24
      $region23: #{layer_forward.7} parent=11 // pred_region
        _
      $region24: #{layer_forward.7} parent=11 // pred_fallthru
        _
    $region12: #{layer_forward.7} parent=5 // pred_fallthru
      _
    %p149 = scmp.lt.s32.totalorder %s10, 2
    // Predicated region
    $region25: #{layer_forward.7} parent=5 // pred_check
      %p150 = pneg %p149
    $region26: #{layer_forward.7} parent=5 // pred_check_branch
      %152 = sbr.rel (%p150) target = $region28
    $region27: #{layer_forward.7} parent=5 // pred_region
      // Predicated region
      $region29: #{layer_forward.7} parent=27 // pred_check
        %p153 = pneg %p30
      $region30: #{layer_forward.7} parent=27 // pred_check_branch
        %155 = sbr.rel (%p153) target = $region32
      $region31: #{layer_forward.7} parent=27 // pred_region
        %p156 = scmp.lt.s32.totalorder %s10, 1
        %s157 = scalar_select %p156, %s10, 1
        %s158 = smul.addr %s157, 8
        %s159 = scalar_lea.vmem %s0, %s158
      $region32: #{layer_forward.7} parent=27 // pred_fallthru
        _
    $region28: #{layer_forward.7} parent=5 // pred_fallthru
      _
    %p160 = scmp.le.s32.totalorder 1, %s10
    %p161 = scmp.lt.s32.totalorder %s10, 3
    %p162 = pnand %p160, %p161
    %p163 = pneg %p162
    // Predicated region
    $region33: #{layer_forward.7} parent=5 // pred_check
      _
    $region34: #{layer_forward.7} parent=5 // pred_check_branch
      %165 = sbr.rel (%p162) target = $region36
    $region35: #{layer_forward.7} parent=5 // pred_region
      %s166 = ssub.s32 %s10, 1
      %p167 = scmp.lt.s32.totalorder %s15, 1
      %s168 = scalar_select %p167, %s15, 1
      %s169 = smul.addr %s168, 8
      %s170 = scalar_lea.vmem %s0, %s169
      %p171 = pneg %p36
      %p172 = pneg %p33
      %p173 = pneg %p57
      %p174 = pneg %p54
      %p175 = pneg %p78
      %p176 = pneg %p75
      %p177 = pneg %p99
      %p178 = pneg %p96
      %p179 = pneg %p125
      %p180 = pneg %p122
      %p181 = scmp.lt.s32.totalorder %s15, 1
      %s182 = scalar_select %p181, %s15, 1
      %s183 = smul.addr %s182, 8
      %s184 = scalar_lea.vmem %s4, %s183
      %p185 = scmp.lt.s32.totalorder %s15, 1
      %s186 = scalar_select %p185, %s15, 1
      %s187 = smul.addr %s186, 8
      %s188 = scalar_lea.vmem %s0, %s187
      %p189 = scmp.lt.s32.totalorder %s15, 1
      %s190 = scalar_select %p189, %s15, 1
      %s191 = smul.addr %s190, 8
      %s192 = scalar_lea.vmem %s4, %s191
      %v194 = vld [vmem:[%s188] sm:$0xff]
      %v195 = vpack.c.bf16 %v194, %v194
      %v196 = vld [vmem:[%s1] sm:$0xf]
      %v197 = vld [vmem:[%s1 + $0x4] sm:$0xf]
      %v198 = vld [vmem:[%s1 + $0x8] sm:$0xf]
      %v199 = vld [vmem:[%s1 + $0xc] sm:$0xf]
      %v200 = vld [vmem:[%s2] sm:$0x1]
      %v202 = vlaneseq
      %v203 = vshrl.u32 %v202, 7
      %v204 = vsub.s32 0, %v203
      %v205 = vrot.slane %v200, %v204
      %v211 = vunpack.c.l.b16 %v196
      %v212 = vunpack.c.l.b16 %v197
      %v213 = vunpack.c.l.b16 %v198
      %v214 = vunpack.c.l.b16 %v199
      %v215 = vpack.c.b16 %v212, %v211
      %v216 = vpack.c.b16 %v214, %v213
      %vm219 = vcmask 261120
      %v221 = vsel %vm219, %v195, 0
      %223 = vmatprep.subr.bf16.mxu0 0
      %224 = vmatpush1.bf16.msra.mxu0 %v215
      %225 = vmatprep.subr.bf16.mxu0 0
      %226 = vmatpush1.bf16.msra.mxu0 %v216
      %227 = vmatprep.subr.bf16.mxu0 0
      %228 = vmatpush1.bf16.msra.mxu0 0
      %229 = vmatprep.subr.bf16.mxu0 0
      %230 = vmatpush1.bf16.msra.mxu0 0
      %231 = vmatprep.subr.bf16.mxu0 0
      %232 = vmatpush1.bf16.msra.mxu0 0
      %233 = vmatprep.subr.bf16.mxu0 0
      %234 = vmatpush1.bf16.msra.mxu0 0
      %235 = vmatprep.subr.bf16.mxu0 0
      %236 = vmatpush1.bf16.msra.mxu0 0
      %237 = vmatprep.subr.bf16.mxu0 0
      %238 = vmatpush1.bf16.msra.mxu0 0
      %239 = vmatprep.subr.bf16.mxu0 0
      %240 = vmatpush1.bf16.msra.mxu0 0
      %241 = vmatprep.subr.bf16.mxu0 0
      %242 = vmatpush1.bf16.msra.mxu0 0
      %243 = vmatprep.subr.bf16.mxu0 0
      %244 = vmatpush1.bf16.msra.mxu0 0
      %245 = vmatprep.subr.bf16.mxu0 0
      %246 = vmatpush1.bf16.msra.mxu0 0
      %247 = vmatprep.subr.bf16.mxu0 0
      %248 = vmatpush1.bf16.msra.mxu0 0
      %249 = vmatprep.subr.bf16.mxu0 0
      %250 = vmatpush1.bf16.msra.mxu0 0
      %251 = vmatprep.subr.bf16.mxu0 0
      %252 = vmatpush1.bf16.msra.mxu0 0
      %253 = vmatprep.subr.bf16.mxu0 0
      %254 = vmatpush1.bf16.msra.mxu0 0
      %255 = vmatprep.mubr.bf16.mxu0 0
      %256 = vmatmul.mubr.bf16.gmra.mrb[0].mxu0 %v221
      %v257 = vpop.f32.mrb[0].mxu0
      %v258 = vadd.f32 %v205, %v257
      %v259 = vpop.f32.mrb[0].mxu0
      %v260 = vpop.f32.mrb[0].mxu0
      %v261 = vpop.f32.mrb[0].mxu0
      %262 = vdwg.mxu0
      %v263 = vld [vmem:[%s3] sm:$0xff]
      %v264 = vadd.f32 %v258, %v263
      %265 = vst [vmem:[%s192] sm:$0xff] %v264
      %p266 = scmp.lt.s32.totalorder %s15, 1
      %s267 = scalar_select %p266, %s15, 1
      %s268 = smul.addr %s267, 8
      %s269 = scalar_lea.vmem %s4, %s268
      // Predicated region
      $region37: #{layer_forward.7} parent=35 // pred_check
        %p270 = pneg %p122
      $region38: #{layer_forward.7} parent=35 // pred_check_branch
        %272 = sbr.rel (%p270) target = $region40
      $region39: #{layer_forward.7} parent=35 // pred_region
        _
      $region40: #{layer_forward.7} parent=35 // pred_fallthru
        _
    $region36: #{layer_forward.7} parent=5 // pred_fallthru
      _
    %p273 = scmp.le.s32.totalorder 2, %s10
    // Predicated region
    $region41: #{layer_forward.7} parent=5 // pred_check
      %p274 = pneg %p273
    $region42: #{layer_forward.7} parent=5 // pred_check_branch
      %276 = sbr.rel (%p274) target = $region44
    $region43: #{layer_forward.7} parent=5 // pred_region
      %s277 = ssub.s32 %s10, 2
      // Predicated region
      $region45: #{layer_forward.7} parent=43 // pred_check
        %p278 = pneg %p128
      $region46: #{layer_forward.7} parent=43 // pred_check_branch
        %280 = sbr.rel (%p278) target = $region48
      $region47: #{layer_forward.7} parent=43 // pred_region
        %p281 = scmp.lt.s32.totalorder %s16, 1
        %s282 = scalar_select %p281, %s16, 1
        %s283 = smul.addr %s282, 8
        %s284 = scalar_lea.vmem %s4, %s283
      $region48: #{layer_forward.7} parent=43 // pred_fallthru
        _
    $region44: #{layer_forward.7} parent=5 // pred_fallthru
      _
  $region6: #{layer_forward.7} parent=0 // loop_footer
    %s14 = sadd.s32 1, %s10
  $region7: #{layer_forward.7} parent=0 // loop_footer_branch
    %9 = sbr.rel target = $region3
  $region8: #{layer_forward.7} parent=0 // loop_exit
    _

// kernel: layer_forward.8
$region0: #{layer_forward.8}
  #allocation0 [shape = 'u32[]', space=smem, size = 0x4, offset = 0x4, fixed_abs, tag = 'smem constant byte address 0x4 - core index']
  #allocation1 [shape = 'u32[144,128]{1,0:T(1,128)}', space=vmem, size = 0x12000, scoped, tag = 'internal scratch']
  %s0 = inlined_call_operand.vmem [shape: f32[2,8,128], index: 0, kind: input, shape index: {}, may-alias: {0,1}]
  %s1 = inlined_call_operand.vmem [shape: f32[2,8,128], index: 1, kind: input, shape index: {}, may-alias: {0,1}]
  %s2 = inlined_call_operand.vmem [shape: bf16[128,128], index: 2, kind: input, shape index: {}]
  %s3 = inlined_call_operand.vmem [shape: bf16[128,256], index: 3, kind: input, shape index: {}]
  %s4 = inlined_call_operand.vmem [shape: f32[1,256], index: 4, kind: input, shape index: {}]
  %s5 = inlined_call_operand.vmem [shape: bf16[128,128], index: 5, kind: input, shape index: {}]
  %s6 = inlined_call_operand.vmem [shape: bf16[128,128], index: 6, kind: input, shape index: {}]
  %s7 = inlined_call_operand.vmem [shape: f32[1,128], index: 7, kind: input, shape index: {}]
  %s8 = inlined_call_operand.vmem [shape: bf16[128,128], index: 8, kind: input, shape index: {}]
  %s9 = inlined_call_operand.vmem [shape: f32[16,128], index: 9, kind: input, shape index: {}]
  %s10 = inlined_call_operand.vmem [shape: f32[2,8,128], index: 10, kind: output, shape index: {}]
  %s11 = sld [smem:[#allocation0]]
  $region73: #{layer_forward.8} parent=0
    _
  %s13 = ssub.s32 1, %s11
  %s14 = scalar_select 0, %s13, %s11
  loop: start=0, step=1, limit=4
  $region2: #{layer_forward.8} parent=0 // loop_pre_header
    _
  $region3: #{layer_forward.8} parent=0 // loop_header
    %s16 = sphi 0, %s20
    %p17 = scmp.ge.s32.totalorder %s16, 4
    %s26 = sphi 0, %s28
    %s29 = sphi 0, %s26
    %s30 = sphi 0, %s29
    %s46 = sphi 0, %s30
    %s52 = sphi 0, %s54
    %s55 = sphi 0, %s52
    %s56 = sphi 0, %s55
    %s72 = sphi 0, %s56
    %s76 = sphi 0, %s76
    %s78 = sphi 0, %s76
    %s79 = sphi 0, %s78
    %s93 = sphi 0, %s79
    %s97 = sphi 0, %s97
    %s99 = sphi 0, %s97
    %s100 = sphi 0, %s99
    %s114 = sphi 0, %s100
    %s118 = sphi 0, %s118
    %s120 = sphi 0, %s118
    %s121 = sphi 0, %s120
    %s135 = sphi 0, %s121
    %s139 = sphi 0, %s139
    %s141 = sphi 0, %s139
    %s142 = sphi 0, %s141
    %s156 = sphi 0, %s142
    %s160 = sphi 0, %s160
    %s162 = sphi 0, %s160
    %s163 = sphi 0, %s162
    %s177 = sphi 0, %s163
    %s181 = sphi 0, %s181
    %s183 = sphi 0, %s181
    %s184 = sphi 0, %s183
    %s198 = sphi 0, %s184
    %s202 = sphi 0, %s202
    %s204 = sphi 0, %s202
    %s205 = sphi 0, %s204
    %s219 = sphi 0, %s205
    %s223 = sphi 0, %s223
    %s225 = sphi 0, %s223
    %s226 = sphi 0, %s225
    %s240 = sphi 0, %s226
    %s246 = sphi 0, %s248
    %s249 = sphi 0, %s246
    %s250 = sphi 0, %s249
    %s266 = sphi 0, %s250
  $region4: #{layer_forward.8} parent=0 // loop_header_branch
    %19 = sbr.rel (%p17) target = $region8
  $region5: #{layer_forward.8} parent=0 // loop_body
    %s21 = ssub.s32 %s16, 1
    %s22 = ssub.s32 %s16, 2
    %s23 = sadd.s32 %s16, 1
    %s24 = ssub.s32 %s16, %s23
    %p25 = scmp.eq.s32.totalorder %s24, 0
    %s27 = sadd.s32 %s26, 1
    %s28 = scalar_select %p25, %s26, %s27
    %p31 = pneg %p25
    %p32 = scmp.eq.s32.totalorder %s16, 1
    %p33 = por %p31, %p32
    %p34 = scmp.ne.s32.totalorder %s26, %s29
    %p35 = scmp.eq.s32.totalorder %s16, 0
    %p36 = por %p34, %p35
    %p37 = scmp.ne.s32.totalorder %s26, %s29
    %p38 = scmp.eq.s32.totalorder %s21, 1
    %p39 = por %p37, %p38
    %p40 = scmp.ne.s32.totalorder %s29, %s30
    %p41 = scmp.eq.s32.totalorder %s21, 0
    %p42 = por %p40, %p41
    %p43 = scmp.ne.s32.totalorder %s29, %s30
    %p44 = scmp.eq.s32.totalorder %s22, 1
    %p45 = por %p43, %p44
    %p47 = scmp.ne.s32.totalorder %s30, %s46
    %p48 = scmp.eq.s32.totalorder %s22, 0
    %p49 = por %p47, %p48
    %s50 = ssub.s32 %s16, %s23
    %p51 = scmp.eq.s32.totalorder %s50, 0
    %s53 = sadd.s32 %s52, 1
    %s54 = scalar_select %p51, %s52, %s53
    %p57 = pneg %p51
    %p58 = scmp.eq.s32.totalorder %s16, 1
    %p59 = por %p57, %p58
    %p60 = scmp.ne.s32.totalorder %s52, %s55
    %p61 = scmp.eq.s32.totalorder %s16, 0
    %p62 = por %p60, %p61
    %p63 = scmp.ne.s32.totalorder %s52, %s55
    %p64 = scmp.eq.s32.totalorder %s21, 1
    %p65 = por %p63, %p64
    %p66 = scmp.ne.s32.totalorder %s55, %s56
    %p67 = scmp.eq.s32.totalorder %s21, 0
    %p68 = por %p66, %p67
    %p69 = scmp.ne.s32.totalorder %s55, %s56
    %p70 = scmp.eq.s32.totalorder %s22, 1
    %p71 = por %p69, %p70
    %p73 = scmp.ne.s32.totalorder %s56, %s72
    %p74 = scmp.eq.s32.totalorder %s22, 0
    %p75 = por %p73, %p74
    %s77 = sadd.s32 %s76, 1
    %p80 = scmp.eq.s32.totalorder %s16, 1
    %p81 = scmp.ne.s32.totalorder %s76, %s78
    %p82 = scmp.eq.s32.totalorder %s16, 0
    %p83 = por %p81, %p82
    %p84 = scmp.ne.s32.totalorder %s76, %s78
    %p85 = scmp.eq.s32.totalorder %s21, 1
    %p86 = por %p84, %p85
    %p87 = scmp.ne.s32.totalorder %s78, %s79
    %p88 = scmp.eq.s32.totalorder %s21, 0
    %p89 = por %p87, %p88
    %p90 = scmp.ne.s32.totalorder %s78, %s79
    %p91 = scmp.eq.s32.totalorder %s22, 1
    %p92 = por %p90, %p91
    %p94 = scmp.ne.s32.totalorder %s79, %s93
    %p95 = scmp.eq.s32.totalorder %s22, 0
    %p96 = por %p94, %p95
    %s98 = sadd.s32 %s97, 1
    %p101 = scmp.eq.s32.totalorder %s16, 1
    %p102 = scmp.ne.s32.totalorder %s97, %s99
    %p103 = scmp.eq.s32.totalorder %s16, 0
    %p104 = por %p102, %p103
    %p105 = scmp.ne.s32.totalorder %s97, %s99
    %p106 = scmp.eq.s32.totalorder %s21, 1
    %p107 = por %p105, %p106
    %p108 = scmp.ne.s32.totalorder %s99, %s100
    %p109 = scmp.eq.s32.totalorder %s21, 0
    %p110 = por %p108, %p109
    %p111 = scmp.ne.s32.totalorder %s99, %s100
    %p112 = scmp.eq.s32.totalorder %s22, 1
    %p113 = por %p111, %p112
    %p115 = scmp.ne.s32.totalorder %s100, %s114
    %p116 = scmp.eq.s32.totalorder %s22, 0
    %p117 = por %p115, %p116
    %s119 = sadd.s32 %s118, 1
    %p122 = scmp.eq.s32.totalorder %s16, 1
    %p123 = scmp.ne.s32.totalorder %s118, %s120
    %p124 = scmp.eq.s32.totalorder %s16, 0
    %p125 = por %p123, %p124
    %p126 = scmp.ne.s32.totalorder %s118, %s120
    %p127 = scmp.eq.s32.totalorder %s21, 1
    %p128 = por %p126, %p127
    %p129 = scmp.ne.s32.totalorder %s120, %s121
    %p130 = scmp.eq.s32.totalorder %s21, 0
    %p131 = por %p129, %p130
    %p132 = scmp.ne.s32.totalorder %s120, %s121
    %p133 = scmp.eq.s32.totalorder %s22, 1
    %p134 = por %p132, %p133
    %p136 = scmp.ne.s32.totalorder %s121, %s135
    %p137 = scmp.eq.s32.totalorder %s22, 0
    %p138 = por %p136, %p137
    %s140 = sadd.s32 %s139, 1
    %p143 = scmp.eq.s32.totalorder %s16, 1
    %p144 = scmp.ne.s32.totalorder %s139, %s141
    %p145 = scmp.eq.s32.totalorder %s16, 0
    %p146 = por %p144, %p145
    %p147 = scmp.ne.s32.totalorder %s139, %s141
    %p148 = scmp.eq.s32.totalorder %s21, 1
    %p149 = por %p147, %p148
    %p150 = scmp.ne.s32.totalorder %s141, %s142
    %p151 = scmp.eq.s32.totalorder %s21, 0
    %p152 = por %p150, %p151
    %p153 = scmp.ne.s32.totalorder %s141, %s142
    %p154 = scmp.eq.s32.totalorder %s22, 1
    %p155 = por %p153, %p154
    %p157 = scmp.ne.s32.totalorder %s142, %s156
    %p158 = scmp.eq.s32.totalorder %s22, 0
    %p159 = por %p157, %p158
    %s161 = sadd.s32 %s160, 1
    %p164 = scmp.eq.s32.totalorder %s16, 1
    %p165 = scmp.ne.s32.totalorder %s160, %s162
    %p166 = scmp.eq.s32.totalorder %s16, 0
    %p167 = por %p165, %p166
    %p168 = scmp.ne.s32.totalorder %s160, %s162
    %p169 = scmp.eq.s32.totalorder %s21, 1
    %p170 = por %p168, %p169
    %p171 = scmp.ne.s32.totalorder %s162, %s163
    %p172 = scmp.eq.s32.totalorder %s21, 0
    %p173 = por %p171, %p172
    %p174 = scmp.ne.s32.totalorder %s162, %s163
    %p175 = scmp.eq.s32.totalorder %s22, 1
    %p176 = por %p174, %p175
    %p178 = scmp.ne.s32.totalorder %s163, %s177
    %p179 = scmp.eq.s32.totalorder %s22, 0
    %p180 = por %p178, %p179
    %s182 = sadd.s32 %s181, 1
    %p185 = scmp.eq.s32.totalorder %s16, 1
    %p186 = scmp.ne.s32.totalorder %s181, %s183
    %p187 = scmp.eq.s32.totalorder %s16, 0
    %p188 = por %p186, %p187
    %p189 = scmp.ne.s32.totalorder %s181, %s183
    %p190 = scmp.eq.s32.totalorder %s21, 1
    %p191 = por %p189, %p190
    %p192 = scmp.ne.s32.totalorder %s183, %s184
    %p193 = scmp.eq.s32.totalorder %s21, 0
    %p194 = por %p192, %p193
    %p195 = scmp.ne.s32.totalorder %s183, %s184
    %p196 = scmp.eq.s32.totalorder %s22, 1
    %p197 = por %p195, %p196
    %p199 = scmp.ne.s32.totalorder %s184, %s198
    %p200 = scmp.eq.s32.totalorder %s22, 0
    %p201 = por %p199, %p200
    %s203 = sadd.s32 %s202, 1
    %p206 = scmp.eq.s32.totalorder %s16, 1
    %p207 = scmp.ne.s32.totalorder %s202, %s204
    %p208 = scmp.eq.s32.totalorder %s16, 0
    %p209 = por %p207, %p208
    %p210 = scmp.ne.s32.totalorder %s202, %s204
    %p211 = scmp.eq.s32.totalorder %s21, 1
    %p212 = por %p210, %p211
    %p213 = scmp.ne.s32.totalorder %s204, %s205
    %p214 = scmp.eq.s32.totalorder %s21, 0
    %p215 = por %p213, %p214
    %p216 = scmp.ne.s32.totalorder %s204, %s205
    %p217 = scmp.eq.s32.totalorder %s22, 1
    %p218 = por %p216, %p217
    %p220 = scmp.ne.s32.totalorder %s205, %s219
    %p221 = scmp.eq.s32.totalorder %s22, 0
    %p222 = por %p220, %p221
    %s224 = sadd.s32 %s223, 1
    %p227 = scmp.eq.s32.totalorder %s16, 1
    %p228 = scmp.ne.s32.totalorder %s223, %s225
    %p229 = scmp.eq.s32.totalorder %s16, 0
    %p230 = por %p228, %p229
    %p231 = scmp.ne.s32.totalorder %s223, %s225
    %p232 = scmp.eq.s32.totalorder %s21, 1
    %p233 = por %p231, %p232
    %p234 = scmp.ne.s32.totalorder %s225, %s226
    %p235 = scmp.eq.s32.totalorder %s21, 0
    %p236 = por %p234, %p235
    %p237 = scmp.ne.s32.totalorder %s225, %s226
    %p238 = scmp.eq.s32.totalorder %s22, 1
    %p239 = por %p237, %p238
    %p241 = scmp.ne.s32.totalorder %s226, %s240
    %p242 = scmp.eq.s32.totalorder %s22, 0
    %p243 = por %p241, %p242
    %s244 = ssub.s32 %s16, %s23
    %p245 = scmp.eq.s32.totalorder %s244, 0
    %s247 = sadd.s32 %s246, 1
    %s248 = scalar_select %p245, %s246, %s247
    %p251 = pneg %p245
    %p252 = scmp.eq.s32.totalorder %s16, 1
    %p253 = por %p251, %p252
    %p254 = scmp.ne.s32.totalorder %s246, %s249
    %p255 = scmp.eq.s32.totalorder %s16, 0
    %p256 = por %p254, %p255
    %p257 = scmp.ne.s32.totalorder %s246, %s249
    %p258 = scmp.eq.s32.totalorder %s21, 1
    %p259 = por %p257, %p258
    %p260 = scmp.ne.s32.totalorder %s249, %s250
    %p261 = scmp.eq.s32.totalorder %s21, 0
    %p262 = por %p260, %p261
    %p263 = scmp.ne.s32.totalorder %s249, %s250
    %p264 = scmp.eq.s32.totalorder %s22, 1
    %p265 = por %p263, %p264
    %p267 = scmp.ne.s32.totalorder %s250, %s266
    %p268 = scmp.eq.s32.totalorder %s22, 0
    %p269 = por %p267, %p268
    %p270 = scmp.le.s32.totalorder 1, %s16
    %p271 = scmp.lt.s32.totalorder %s16, 3
    %p272 = pnand %p270, %p271
    %p273 = pneg %p272
    // Predicated region
    $region9: #{layer_forward.8} parent=5 // pred_check
      _
    $region10: #{layer_forward.8} parent=5 // pred_check_branch
      %275 = sbr.rel (%p272) target = $region12
    $region11: #{layer_forward.8} parent=5 // pred_region
      %s276 = ssub.s32 %s16, 1
      // Predicated region
      $region13: #{layer_forward.8} parent=11 // pred_check
        %p277 = pneg %p89
      $region14: #{layer_forward.8} parent=11 // pred_check_branch
        %279 = sbr.rel (%p277) target = $region16
      $region15: #{layer_forward.8} parent=11 // pred_region
        _
      $region16: #{layer_forward.8} parent=11 // pred_fallthru
        _
      // Predicated region
      $region17: #{layer_forward.8} parent=11 // pred_check
        %p280 = pneg %p110
      $region18: #{layer_forward.8} parent=11 // pred_check_branch
        %282 = sbr.rel (%p280) target = $region20
      $region19: #{layer_forward.8} parent=11 // pred_region
        _
      $region20: #{layer_forward.8} parent=11 // pred_fallthru
        _
      // Predicated region
      $region21: #{layer_forward.8} parent=11 // pred_check
        %p283 = pneg %p131
      $region22: #{layer_forward.8} parent=11 // pred_check_branch
        %285 = sbr.rel (%p283) target = $region24
      $region23: #{layer_forward.8} parent=11 // pred_region
        _
      $region24: #{layer_forward.8} parent=11 // pred_fallthru
        _
      // Predicated region
      $region25: #{layer_forward.8} parent=11 // pred_check
        %p286 = pneg %p152
      $region26: #{layer_forward.8} parent=11 // pred_check_branch
        %288 = sbr.rel (%p286) target = $region28
      $region27: #{layer_forward.8} parent=11 // pred_region
        _
      $region28: #{layer_forward.8} parent=11 // pred_fallthru
        _
      // Predicated region
      $region29: #{layer_forward.8} parent=11 // pred_check
        %p289 = pneg %p173
      $region30: #{layer_forward.8} parent=11 // pred_check_branch
        %291 = sbr.rel (%p289) target = $region32
      $region31: #{layer_forward.8} parent=11 // pred_region
        _
      $region32: #{layer_forward.8} parent=11 // pred_fallthru
        _
      // Predicated region
      $region33: #{layer_forward.8} parent=11 // pred_check
        %p292 = pneg %p194
      $region34: #{layer_forward.8} parent=11 // pred_check_branch
        %294 = sbr.rel (%p292) target = $region36
      $region35: #{layer_forward.8} parent=11 // pred_region
        _
      $region36: #{layer_forward.8} parent=11 // pred_fallthru
        _
      // Predicated region
      $region37: #{layer_forward.8} parent=11 // pred_check
        %p295 = pneg %p215
      $region38: #{layer_forward.8} parent=11 // pred_check_branch
        %297 = sbr.rel (%p295) target = $region40
      $region39: #{layer_forward.8} parent=11 // pred_region
        _
      $region40: #{layer_forward.8} parent=11 // pred_fallthru
        _
      // Predicated region
      $region41: #{layer_forward.8} parent=11 // pred_check
        %p298 = pneg %p236
      $region42: #{layer_forward.8} parent=11 // pred_check_branch
        %300 = sbr.rel (%p298) target = $region44
      $region43: #{layer_forward.8} parent=11 // pred_region
        _
      $region44: #{layer_forward.8} parent=11 // pred_fallthru
        _
    $region12: #{layer_forward.8} parent=5 // pred_fallthru
      _
    %p301 = scmp.lt.s32.totalorder %s16, 2
    // Predicated region
    $region45: #{layer_forward.8} parent=5 // pred_check
      %p302 = pneg %p301
    $region46: #{layer_forward.8} parent=5 // pred_check_branch
      %304 = sbr.rel (%p302) target = $region48
    $region47: #{layer_forward.8} parent=5 // pred_region
      // Predicated region
      $region49: #{layer_forward.8} parent=47 // pred_check
        %p305 = pneg %p36
      $region50: #{layer_forward.8} parent=47 // pred_check_branch
        %307 = sbr.rel (%p305) target = $region52
      $region51: #{layer_forward.8} parent=47 // pred_region
        %p308 = scmp.lt.s32.totalorder %s16, 1
        %s309 = scalar_select %p308, %s16, 1
        %s310 = smul.addr %s309, 8
        %s311 = scalar_lea.vmem %s0, %s310
      $region52: #{layer_forward.8} parent=47 // pred_fallthru
        _
      // Predicated region
      $region53: #{layer_forward.8} parent=47 // pred_check
        %p312 = pneg %p62
      $region54: #{layer_forward.8} parent=47 // pred_check_branch
        %314 = sbr.rel (%p312) target = $region56
      $region55: #{layer_forward.8} parent=47 // pred_region
        %p315 = scmp.lt.s32.totalorder %s16, 1
        %s316 = scalar_select %p315, %s16, 1
        %s317 = smul.addr %s316, 8
        %s318 = scalar_lea.vmem %s1, %s317
      $region56: #{layer_forward.8} parent=47 // pred_fallthru
        _
    $region48: #{layer_forward.8} parent=5 // pred_fallthru
      _
    %p319 = scmp.le.s32.totalorder 1, %s16
    %p320 = scmp.lt.s32.totalorder %s16, 3
    %p321 = pnand %p319, %p320
    %p322 = pneg %p321
    // Predicated region
    $region57: #{layer_forward.8} parent=5 // pred_check
      _
    $region58: #{layer_forward.8} parent=5 // pred_check_branch
      %324 = sbr.rel (%p321) target = $region60
    $region59: #{layer_forward.8} parent=5 // pred_region
      %s325 = ssub.s32 %s16, 1
      %p326 = scmp.lt.s32.totalorder %s21, 1
      %s327 = scalar_select %p326, %s21, 1
      %s328 = smul.addr %s327, 8
      %s329 = scalar_lea.vmem %s0, %s328
      %p330 = pneg %p42
      %p331 = pneg %p39
      %p332 = scmp.lt.s32.totalorder %s21, 1
      %s333 = scalar_select %p332, %s21, 1
      %s334 = smul.addr %s333, 8
      %s335 = scalar_lea.vmem %s1, %s334
      %p336 = pneg %p68
      %p337 = pneg %p65
      %p338 = pneg %p89
      %p339 = pneg %p86
      %p340 = pneg %p110
      %p341 = pneg %p107
      %p342 = pneg %p131
      %p343 = pneg %p128
      %p344 = pneg %p152
      %p345 = pneg %p149
      %p346 = pneg %p173
      %p347 = pneg %p170
      %p348 = pneg %p194
      %p349 = pneg %p191
      %p350 = pneg %p215
      %p351 = pneg %p212
      %p352 = pneg %p236
      %p353 = pneg %p233
      %p354 = pneg %p262
      %p355 = pneg %p259
      %p356 = scmp.lt.s32.totalorder %s21, 1
      %s357 = scalar_select %p356, %s21, 1
      %s358 = smul.addr %s357, 8
      %s359 = scalar_lea.vmem %s10, %s358
      %p360 = scmp.lt.s32.totalorder %s21, 1
      %s361 = scalar_select %p360, %s21, 1
      %s362 = smul.addr %s361, 8
      %s363 = scalar_lea.vmem %s0, %s362
      %p364 = scmp.lt.s32.totalorder %s21, 1
      %s365 = scalar_select %p364, %s21, 1
      %s366 = smul.addr %s365, 8
      %s367 = scalar_lea.vmem %s1, %s366
      %p368 = scmp.lt.s32.totalorder %s21, 1
      %s369 = scalar_select %p368, %s21, 1
      %s370 = smul.addr %s369, 8
      %s371 = scalar_lea.vmem %s10, %s370
      %v373 = vld [vmem:[%s363] sm:$0xff]
      %v374 = vld [vmem:[%s367] sm:$0xff]
      %v375 = vld [vmem:[%s9] sm:$0x1]
      %v376 = vld [vmem:[%s9 + $0x1] sm:$0x1]
      %v377 = vld [vmem:[%s9 + $0x2] sm:$0x1]
      %v378 = vld [vmem:[%s9 + $0x3] sm:$0x1]
      %v379 = vld [vmem:[%s9 + $0x4] sm:$0x1]
      %v380 = vld [vmem:[%s9 + $0x5] sm:$0x1]
      %v381 = vld [vmem:[%s9 + $0x6] sm:$0x1]
      %v382 = vld [vmem:[%s9 + $0x7] sm:$0x1]
      %v383 = vld [vmem:[%s9 + $0x8] sm:$0x1]
      %v384 = vld [vmem:[%s9 + $0x9] sm:$0x1]
      %v385 = vld [vmem:[%s2] sm:$0xf]
      %v386 = vld [vmem:[%s2 + $0x4] sm:$0xf]
      %v387 = vld [vmem:[%s2 + $0x8] sm:$0xf]
      %v388 = vld [vmem:[%s2 + $0xc] sm:$0xf]
      %v389 = vld [vmem:[%s2 + $0x10] sm:$0xf]
      %v390 = vld [vmem:[%s2 + $0x14] sm:$0xf]
      %v391 = vld [vmem:[%s2 + $0x18] sm:$0xf]
      %v392 = vld [vmem:[%s2 + $0x1c] sm:$0xf]
      %v393 = vld [vmem:[%s2 + $0x20] sm:$0xf]
      %v394 = vld [vmem:[%s2 + $0x24] sm:$0xf]
      %v395 = vld [vmem:[%s2 + $0x28] sm:$0xf]
      %v396 = vld [vmem:[%s2 + $0x2c] sm:$0xf]
      %v397 = vld [vmem:[%s2 + $0x30] sm:$0xf]
      %v398 = vld [vmem:[%s2 + $0x34] sm:$0xf]
      %v399 = vld [vmem:[%s2 + $0x38] sm:$0xf]
      %v400 = vld [vmem:[%s2 + $0x3c] sm:$0xf]
      %v401 = vpack.c.bf16 %v373, %v373
      %v402 = vlaneseq
      %v403 = vshrl.u32 %v402, 7
      %v404 = vsub.s32 0, %v403
      %v405 = vrot.slane %v375, %v404
      %v422 = vunpack.c.l.b16 %v385
      %v423 = vunpack.c.l.b16 %v386
      %v424 = vunpack.c.l.b16 %v387
      %v425 = vunpack.c.l.b16 %v388
      %v426 = vunpack.c.l.b16 %v389
      %v427 = vunpack.c.l.b16 %v390
      %v428 = vunpack.c.l.b16 %v391
      %v429 = vunpack.c.l.b16 %v392
      %v430 = vunpack.c.l.b16 %v393
      %v431 = vunpack.c.l.b16 %v394
      %v432 = vunpack.c.l.b16 %v395
      %v433 = vunpack.c.l.b16 %v396
      %v434 = vunpack.c.l.b16 %v397
      %v435 = vunpack.c.l.b16 %v398
      %v436 = vunpack.c.l.b16 %v399
      %v437 = vunpack.c.l.b16 %v400
      %v438 = vpack.c.b16 %v423, %v422
      %v439 = vpack.c.b16 %v425, %v424
      %v440 = vpack.c.b16 %v427, %v426
      %v441 = vpack.c.b16 %v429, %v428
      %v442 = vpack.c.b16 %v431, %v430
      %v443 = vpack.c.b16 %v433, %v432
      %v444 = vpack.c.b16 %v435, %v434
      %v445 = vpack.c.b16 %v437, %v436
      %454 = vmatprep.subr.bf16.mxu0 0
      %455 = vmatpush1.bf16.msra.mxu0 %v438
      %456 = vmatprep.subr.bf16.mxu0 0
      %457 = vmatpush1.bf16.msra.mxu0 %v439
      %458 = vmatprep.subr.bf16.mxu0 0
      %459 = vmatpush1.bf16.msra.mxu0 %v440
      %460 = vmatprep.subr.bf16.mxu0 0
      %461 = vmatpush1.bf16.msra.mxu0 %v441
      %462 = vmatprep.subr.bf16.mxu0 0
      %463 = vmatpush1.bf16.msra.mxu0 %v442
      %464 = vmatprep.subr.bf16.mxu0 0
      %465 = vmatpush1.bf16.msra.mxu0 %v443
      %466 = vmatprep.subr.bf16.mxu0 0
      %467 = vmatpush1.bf16.msra.mxu0 %v444
      %468 = vmatprep.subr.bf16.mxu0 0
      %469 = vmatpush1.bf16.msra.mxu0 %v445
      %470 = vmatprep.subr.bf16.mxu0 0
      %471 = vmatpush1.bf16.msra.mxu0 0
      %472 = vmatprep.subr.bf16.mxu0 0
      %473 = vmatpush1.bf16.msra.mxu0 0
      %474 = vmatprep.subr.bf16.mxu0 0
      %475 = vmatpush1.bf16.msra.mxu0 0
      %476 = vmatprep.subr.bf16.mxu0 0
      %477 = vmatpush1.bf16.msra.mxu0 0
      %478 = vmatprep.subr.bf16.mxu0 0
      %479 = vmatpush1.bf16.msra.mxu0 0
      %480 = vmatprep.subr.bf16.mxu0 0
      %481 = vmatpush1.bf16.msra.mxu0 0
      %482 = vmatprep.subr.bf16.mxu0 0
      %483 = vmatpush1.bf16.msra.mxu0 0
      %484 = vmatprep.subr.bf16.mxu0 0
      %485 = vmatpush1.bf16.msra.mxu0 0
      %486 = vmatprep.mubr.bf16.mxu0 0
      %487 = vmatmul.mubr.bf16.gmra.mrb[0].mxu0 %v401
      %v488 = vpop.f32.mrb[0].mxu0
      %v489 = vadd.f32 %v405, %v488
      %v490 = vpop.f32.mrb[0].mxu0
      %v491 = vpop.f32.mrb[0].mxu0
      %v492 = vpop.f32.mrb[0].mxu0
      %493 = vdwg.mxu0
      %v494 = vld [vmem:[%s3] sm:$0xff]
      %v495 = vld [vmem:[%s3 + $0x8] sm:$0xff]
      %v496 = vld [vmem:[%s3 + $0x10] sm:$0xff]
      %v497 = vld [vmem:[%s3 + $0x18] sm:$0xff]
      %v498 = vld [vmem:[%s3 + $0x20] sm:$0xff]
      %v499 = vld [vmem:[%s3 + $0x28] sm:$0xff]
      %v500 = vld [vmem:[%s3 + $0x30] sm:$0xff]
      %v501 = vld [vmem:[%s3 + $0x38] sm:$0xff]
      %v502 = vld [vmem:[%s3 + $0x40] sm:$0xff]
      %v503 = vld [vmem:[%s3 + $0x48] sm:$0xff]
      %v504 = vld [vmem:[%s3 + $0x50] sm:$0xff]
      %v505 = vld [vmem:[%s3 + $0x58] sm:$0xff]
      %v506 = vld [vmem:[%s3 + $0x60] sm:$0xff]
      %v507 = vld [vmem:[%s3 + $0x68] sm:$0xff]
      %v508 = vld [vmem:[%s3 + $0x70] sm:$0xff]
      %v509 = vld [vmem:[%s3 + $0x78] sm:$0xff]
      %v510 = vpack.c.bf16 %v374, %v374
      %v511 = vld [vmem:[%s4] sm:$0x3]
      %v513 = vlaneseq
      %v514 = vshrl.u32 %v513, 7
      %v515 = vsub.s32 0, %v514
      %v516 = vrot.slane %v511, %v515
      %v517 = vlaneseq
      %v518 = vshrl.u32 %v517, 7
      %v519 = vsub.s32 1, %v518
      %v520 = vrot.slane %v511, %v519
      %v539 = vunpack.c.l.b16 %v494
      %v540 = vunpack.c.h.b16 %v494
      %v541 = vunpack.c.l.b16 %v495
      %v542 = vunpack.c.h.b16 %v495
      %v543 = vunpack.c.l.b16 %v496
      %v544 = vunpack.c.h.b16 %v496
      %v545 = vunpack.c.l.b16 %v497
      %v546 = vunpack.c.h.b16 %v497
      %v547 = vunpack.c.l.b16 %v498
      %v548 = vunpack.c.h.b16 %v498
      %v549 = vunpack.c.l.b16 %v499
      %v550 = vunpack.c.h.b16 %v499
      %v551 = vunpack.c.l.b16 %v500
      %v552 = vunpack.c.h.b16 %v500
      %v553 = vunpack.c.l.b16 %v501
      %v554 = vunpack.c.h.b16 %v501
      %v555 = vunpack.c.l.b16 %v502
      %v556 = vunpack.c.h.b16 %v502
      %v557 = vunpack.c.l.b16 %v503
      %v558 = vunpack.c.h.b16 %v503
      %v559 = vunpack.c.l.b16 %v504
      %v560 = vunpack.c.h.b16 %v504
      %v561 = vunpack.c.l.b16 %v505
      %v562 = vunpack.c.h.b16 %v505
      %v563 = vunpack.c.l.b16 %v506
      %v564 = vunpack.c.h.b16 %v506
      %v565 = vunpack.c.l.b16 %v507
      %v566 = vunpack.c.h.b16 %v507
      %v567 = vunpack.c.l.b16 %v508
      %v568 = vunpack.c.h.b16 %v508
      %v569 = vunpack.c.l.b16 %v509
      %v570 = vunpack.c.h.b16 %v509
      %v571 = vpack.c.b16 %v541, %v539
      %v572 = vpack.c.b16 %v542, %v540
      %v573 = vpack.c.b16 %v545, %v543
      %v574 = vpack.c.b16 %v546, %v544
      %v575 = vpack.c.b16 %v549, %v547
      %v576 = vpack.c.b16 %v550, %v548
      %v577 = vpack.c.b16 %v553, %v551
      %v578 = vpack.c.b16 %v554, %v552
      %v579 = vpack.c.b16 %v557, %v555
      %v580 = vpack.c.b16 %v558, %v556
      %v581 = vpack.c.b16 %v561, %v559
      %v582 = vpack.c.b16 %v562, %v560
      %v583 = vpack.c.b16 %v565, %v563
      %v584 = vpack.c.b16 %v566, %v564
      %v585 = vpack.c.b16 %v569, %v567
      %v586 = vpack.c.b16 %v570, %v568
      %603 = vmatprep.subr.bf16.mxu0 %v572
      %604 = vmatpush1.bf16.msra.mxu0 %v571
      %605 = vmatprep.subr.bf16.mxu0 %v574
      %606 = vmatpush1.bf16.msra.mxu0 %v573
      %607 = vmatprep.subr.bf16.mxu0 %v576
      %608 = vmatpush1.bf16.msra.mxu0 %v575
      %609 = vmatprep.subr.bf16.mxu0 %v578
      %610 = vmatpush1.bf16.msra.mxu0 %v577
      %611 = vmatprep.subr.bf16.mxu0 %v580
      %612 = vmatpush1.bf16.msra.mxu0 %v579
      %613 = vmatprep.subr.bf16.mxu0 %v582
      %614 = vmatpush1.bf16.msra.mxu0 %v581
      %615 = vmatprep.subr.bf16.mxu0 %v584
      %616 = vmatpush1.bf16.msra.mxu0 %v583
      %617 = vmatprep.subr.bf16.mxu0 %v586
      %618 = vmatpush1.bf16.msra.mxu0 %v585
      %619 = vmatprep.subr.bf16.mxu0 0
      %620 = vmatpush1.bf16.msra.mxu0 0
      %621 = vmatprep.subr.bf16.mxu0 0
      %622 = vmatpush1.bf16.msra.mxu0 0
      %623 = vmatprep.subr.bf16.mxu0 0
      %624 = vmatpush1.bf16.msra.mxu0 0
      %625 = vmatprep.subr.bf16.mxu0 0
      %626 = vmatpush1.bf16.msra.mxu0 0
      %627 = vmatprep.subr.bf16.mxu0 0
      %628 = vmatpush1.bf16.msra.mxu0 0
      %629 = vmatprep.subr.bf16.mxu0 0
      %630 = vmatpush1.bf16.msra.mxu0 0
      %631 = vmatprep.subr.bf16.mxu0 0
      %632 = vmatpush1.bf16.msra.mxu0 0
      %633 = vmatprep.subr.bf16.mxu0 0
      %634 = vmatpush1.bf16.msra.mxu0 0
      %635 = vmatprep.mubr.bf16.mxu0 0
      %636 = vmatmul.mubr.bf16.gmra.mrb[0].mxu0 %v510
      %v637 = vpop.f32.mrb[0].mxu0
      %v638 = vadd.f32 %v516, %v637
      %v639 = vpop.f32.mrb[0].mxu0
      %v640 = vadd.f32 %v520, %v639
      %v641 = vpop.f32.mrb[0].mxu0
      %v642 = vpop.f32.mrb[0].mxu0
      %643 = vdwg.mxu0
      %v644 = vpack.c.bf16 %v489, %v489
      %v645 = vpack.c.bf16 %v638, %v638
      %vm646 = vcmask 261120
      %v648 = vsel %vm646, %v644, 0
      %v651 = vsel %vm646, %v645, 0
      %653 = vmatprep.subr.bf16.mxu0 0
      %654 = vmatpush1.bf16.xpose.msra.mxu0 %v651
      %655 = vmatprep.subr.bf16.mxu0 0
      %656 = vmatpush1.bf16.xpose.msra.mxu0 0
      %657 = vmatprep.subr.bf16.mxu0 0
      %658 = vmatpush1.bf16.xpose.msra.mxu0 0
      %659 = vmatprep.subr.bf16.mxu0 0
      %660 = vmatpush1.bf16.xpose.msra.mxu0 0
      %661 = vmatprep.subr.bf16.mxu0 0
      %662 = vmatpush1.bf16.xpose.msra.mxu0 0
      %663 = vmatprep.subr.bf16.mxu0 0
      %664 = vmatpush1.bf16.xpose.msra.mxu0 0
      %665 = vmatprep.subr.bf16.mxu0 0
      %666 = vmatpush1.bf16.xpose.msra.mxu0 0
      %667 = vmatprep.subr.bf16.mxu0 0
      %668 = vmatpush1.bf16.xpose.msra.mxu0 0
      %669 = vmatprep.subr.bf16.mxu0 0
      %670 = vmatpush1.bf16.xpose.msra.mxu0 0
      %671 = vmatprep.subr.bf16.mxu0 0
      %672 = vmatpush1.bf16.xpose.msra.mxu0 0
      %673 = vmatprep.subr.bf16.mxu0 0
      %674 = vmatpush1.bf16.xpose.msra.mxu0 0
      %675 = vmatprep.subr.bf16.mxu0 0
      %676 = vmatpush1.bf16.xpose.msra.mxu0 0
      %677 = vmatprep.subr.bf16.mxu0 0
      %678 = vmatpush1.bf16.xpose.msra.mxu0 0
      %679 = vmatprep.subr.bf16.mxu0 0
      %680 = vmatpush1.bf16.xpose.msra.mxu0 0
      %681 = vmatprep.subr.bf16.mxu0 0
      %682 = vmatpush1.bf16.xpose.msra.mxu0 0
      %683 = vmatprep.subr.bf16.mxu0 0
      %684 = vmatpush1.bf16.xpose.msra.mxu0 0
      %685 = vmatprep.mubr.bf16.mxu0 0
      %686 = vmatmul.mubr.bf16.gmra.mrb[0].mxu0 %v648
      %v687 = vpop.f32.mrb[0].mxu0
      %v688 = vadd.f32 0.0, %v687
      %v689 = vpop.f32.mrb[0].mxu0
      %v690 = vpop.f32.mrb[0].mxu0
      %v691 = vpop.f32.mrb[0].mxu0
      %692 = vdwg.mxu0
      %vm693 = vcmask 64512
      %v694 = vsel %vm693, %v688, -inf
      %695 = vmax.xlane.f32.xlu0 %v694
      %v696 = vpop.xlane.xlu0 %695
      %v697 = vsub.f32 %v688, %v696
      %v698 = vmul.f32 %v697, 1.442695
      %v699 = vpow.pop %v698
      %v700 = vsel %vm693, %v699, 0.0
      %701 = vadd.xlane.f32.xlu0 %v700
      %v702 = vpop.xlane.xlu0 %701
      %v703 = vrcp.pop %v702
      %v704 = vmul.f32 %v699, %v703
      %v705 = vpack.c.bf16 %v640, %v640
      %v706 = vpack.c.bf16 %v704, %v704
      %v708 = vsel %vm693, %v706, 0
      %vm710 = vcmask 1043456
      %v712 = vsel %vm710, %v705, 0
      %714 = vmatprep.subr.bf16.mxu0 0
      %715 = vmatpush1.bf16.msra.mxu0 %v712
      %716 = vmatprep.subr.bf16.mxu0 0
      %717 = vmatpush1.bf16.msra.mxu0 0
      %718 = vmatprep.subr.bf16.mxu0 0
      %719 = vmatpush1.bf16.msra.mxu0 0
      %720 = vmatprep.subr.bf16.mxu0 0
      %721 = vmatpush1.bf16.msra.mxu0 0
      %722 = vmatprep.subr.bf16.mxu0 0
      %723 = vmatpush1.bf16.msra.mxu0 0
      %724 = vmatprep.subr.bf16.mxu0 0
      %725 = vmatpush1.bf16.msra.mxu0 0
      %726 = vmatprep.subr.bf16.mxu0 0
      %727 = vmatpush1.bf16.msra.mxu0 0
      %728 = vmatprep.subr.bf16.mxu0 0
      %729 = vmatpush1.bf16.msra.mxu0 0
      %730 = vmatprep.subr.bf16.mxu0 0
      %731 = vmatpush1.bf16.msra.mxu0 0
      %732 = vmatprep.subr.bf16.mxu0 0
      %733 = vmatpush1.bf16.msra.mxu0 0
      %734 = vmatprep.subr.bf16.mxu0 0
      %735 = vmatpush1.bf16.msra.mxu0 0
      %736 = vmatprep.subr.bf16.mxu0 0
      %737 = vmatpush1.bf16.msra.mxu0 0
      %738 = vmatprep.subr.bf16.mxu0 0
      %739 = vmatpush1.bf16.msra.mxu0 0
      %740 = vmatprep.subr.bf16.mxu0 0
      %741 = vmatpush1.bf16.msra.mxu0 0
      %742 = vmatprep.subr.bf16.mxu0 0
      %743 = vmatpush1.bf16.msra.mxu0 0
      %744 = vmatprep.subr.bf16.mxu0 0
      %745 = vmatpush1.bf16.msra.mxu0 0
      %746 = vmatprep.mubr.bf16.mxu0 0
      %747 = vmatmul.mubr.bf16.gmra.mrb[0].mxu0 %v708
      %v748 = vpop.f32.mrb[0].mxu0
      %v749 = vadd.f32 0.0, %v748
      %v750 = vpop.f32.mrb[0].mxu0
      %v751 = vpop.f32.mrb[0].mxu0
      %v752 = vpop.f32.mrb[0].mxu0
      %753 = vdwg.mxu0
      %755 = vrot.lane.b32.xlu0 %v644, 96
      %v756 = vpop.permute.xlu0 %755
      %758 = vrot.lane.b32.xlu0 %v645, 96
      %v759 = vpop.permute.xlu0 %758
      %v761 = vsel %vm646, %v756, 0
      %v764 = vsel %vm646, %v759, 0
      %766 = vmatprep.subr.bf16.mxu0 0
      %767 = vmatpush1.bf16.xpose.msra.mxu0 %v764
      %768 = vmatprep.subr.bf16.mxu0 0
      %769 = vmatpush1.bf16.xpose.msra.mxu0 0
      %770 = vmatprep.subr.bf16.mxu0 0
      %771 = vmatpush1.bf16.xpose.msra.mxu0 0
      %772 = vmatprep.subr.bf16.mxu0 0
      %773 = vmatpush1.bf16.xpose.msra.mxu0 0
      %774 = vmatprep.subr.bf16.mxu0 0
      %775 = vmatpush1.bf16.xpose.msra.mxu0 0
      %776 = vmatprep.subr.bf16.mxu0 0
      %777 = vmatpush1.bf16.xpose.msra.mxu0 0
      %778 = vmatprep.subr.bf16.mxu0 0
      %779 = vmatpush1.bf16.xpose.msra.mxu0 0
      %780 = vmatprep.subr.bf16.mxu0 0
      %781 = vmatpush1.bf16.xpose.msra.mxu0 0
      %782 = vmatprep.subr.bf16.mxu0 0
      %783 = vmatpush1.bf16.xpose.msra.mxu0 0
      %784 = vmatprep.subr.bf16.mxu0 0
      %785 = vmatpush1.bf16.xpose.msra.mxu0 0
      %786 = vmatprep.subr.bf16.mxu0 0
      %787 = vmatpush1.bf16.xpose.msra.mxu0 0
      %788 = vmatprep.subr.bf16.mxu0 0
      %789 = vmatpush1.bf16.xpose.msra.mxu0 0
      %790 = vmatprep.subr.bf16.mxu0 0
      %791 = vmatpush1.bf16.xpose.msra.mxu0 0
      %792 = vmatprep.subr.bf16.mxu0 0
      %793 = vmatpush1.bf16.xpose.msra.mxu0 0
      %794 = vmatprep.subr.bf16.mxu0 0
      %795 = vmatpush1.bf16.xpose.msra.mxu0 0
      %796 = vmatprep.subr.bf16.mxu0 0
      %797 = vmatpush1.bf16.xpose.msra.mxu0 0
      %798 = vmatprep.mubr.bf16.mxu0 0
      %799 = vmatmul.mubr.bf16.gmra.mrb[0].mxu0 %v761
      %v800 = vpop.f32.mrb[0].mxu0
      %v801 = vadd.f32 0.0, %v800
      %v802 = vpop.f32.mrb[0].mxu0
      %v803 = vpop.f32.mrb[0].mxu0
      %v804 = vpop.f32.mrb[0].mxu0
      %805 = vdwg.mxu0
      %v806 = vsel %vm693, %v801, -inf
      %807 = vmax.xlane.f32.xlu0 %v806
      %v808 = vpop.xlane.xlu0 %807
      %v809 = vsub.f32 %v801, %v808
      %v810 = vmul.f32 %v809, 1.442695
      %v811 = vpow.pop %v810
      %v812 = vsel %vm693, %v811, 0.0
      %813 = vadd.xlane.f32.xlu0 %v812
      %v814 = vpop.xlane.xlu0 %813
      %v815 = vrcp.pop %v814
      %v816 = vmul.f32 %v811, %v815
      %v817 = vpack.c.bf16 %v816, %v816
      %819 = vrot.lane.b32.xlu0 %v705, 96
      %v820 = vpop.permute.xlu0 %819
      %v822 = vsel %vm693, %v817, 0
      %v825 = vsel %vm710, %v820, 0
      %827 = vmatprep.subr.bf16.mxu0 0
      %828 = vmatpush1.bf16.msra.mxu0 %v825
      %829 = vmatprep.subr.bf16.mxu0 0
      %830 = vmatpush1.bf16.msra.mxu0 0
      %831 = vmatprep.subr.bf16.mxu0 0
      %832 = vmatpush1.bf16.msra.mxu0 0
      %833 = vmatprep.subr.bf16.mxu0 0
      %834 = vmatpush1.bf16.msra.mxu0 0
      %835 = vmatprep.subr.bf16.mxu0 0
      %836 = vmatpush1.bf16.msra.mxu0 0
      %837 = vmatprep.subr.bf16.mxu0 0
      %838 = vmatpush1.bf16.msra.mxu0 0
      %839 = vmatprep.subr.bf16.mxu0 0
      %840 = vmatpush1.bf16.msra.mxu0 0
      %841 = vmatprep.subr.bf16.mxu0 0
      %842 = vmatpush1.bf16.msra.mxu0 0
      %843 = vmatprep.subr.bf16.mxu0 0
      %844 = vmatpush1.bf16.msra.mxu0 0
      %845 = vmatprep.subr.bf16.mxu0 0
      %846 = vmatpush1.bf16.msra.mxu0 0
      %847 = vmatprep.subr.bf16.mxu0 0
      %848 = vmatpush1.bf16.msra.mxu0 0
      %849 = vmatprep.subr.bf16.mxu0 0
      %850 = vmatpush1.bf16.msra.mxu0 0
      %851 = vmatprep.subr.bf16.mxu0 0
      %852 = vmatpush1.bf16.msra.mxu0 0
      %853 = vmatprep.subr.bf16.mxu0 0
      %854 = vmatpush1.bf16.msra.mxu0 0
      %855 = vmatprep.subr.bf16.mxu0 0
      %856 = vmatpush1.bf16.msra.mxu0 0
      %857 = vmatprep.subr.bf16.mxu0 0
      %858 = vmatpush1.bf16.msra.mxu0 0
      %859 = vmatprep.mubr.bf16.mxu0 0
      %860 = vmatmul.mubr.bf16.gmra.mrb[0].mxu0 %v822
      %v861 = vpop.f32.mrb[0].mxu0
      %v862 = vadd.f32 0.0, %v861
      %v863 = vpop.f32.mrb[0].mxu0
      %v864 = vpop.f32.mrb[0].mxu0
      %v865 = vpop.f32.mrb[0].mxu0
      %866 = vdwg.mxu0
      %867 = vrot.lane.b32.xlu0 %v644, 64
      %v868 = vpop.permute.xlu0 %867
      %869 = vrot.lane.b32.xlu0 %v645, 64
      %v870 = vpop.permute.xlu0 %869
      %v872 = vsel %vm646, %v868, 0
      %v875 = vsel %vm646, %v870, 0
      %877 = vmatprep.subr.bf16.mxu0 0
      %878 = vmatpush1.bf16.xpose.msra.mxu0 %v875
      %879 = vmatprep.subr.bf16.mxu0 0
      %880 = vmatpush1.bf16.xpose.msra.mxu0 0
      %881 = vmatprep.subr.bf16.mxu0 0
      %882 = vmatpush1.bf16.xpose.msra.mxu0 0
      %883 = vmatprep.subr.bf16.mxu0 0
      %884 = vmatpush1.bf16.xpose.msra.mxu0 0
      %885 = vmatprep.subr.bf16.mxu0 0
      %886 = vmatpush1.bf16.xpose.msra.mxu0 0
      %887 = vmatprep.subr.bf16.mxu0 0
      %888 = vmatpush1.bf16.xpose.msra.mxu0 0
      %889 = vmatprep.subr.bf16.mxu0 0
      %890 = vmatpush1.bf16.xpose.msra.mxu0 0
      %891 = vmatprep.subr.bf16.mxu0 0
      %892 = vmatpush1.bf16.xpose.msra.mxu0 0
      %893 = vmatprep.subr.bf16.mxu0 0
      %894 = vmatpush1.bf16.xpose.msra.mxu0 0
      %895 = vmatprep.subr.bf16.mxu0 0
      %896 = vmatpush1.bf16.xpose.msra.mxu0 0
      %897 = vmatprep.subr.bf16.mxu0 0
      %898 = vmatpush1.bf16.xpose.msra.mxu0 0
      %899 = vmatprep.subr.bf16.mxu0 0
      %900 = vmatpush1.bf16.xpose.msra.mxu0 0
      %901 = vmatprep.subr.bf16.mxu0 0
      %902 = vmatpush1.bf16.xpose.msra.mxu0 0
      %903 = vmatprep.subr.bf16.mxu0 0
      %904 = vmatpush1.bf16.xpose.msra.mxu0 0
      %905 = vmatprep.subr.bf16.mxu0 0
      %906 = vmatpush1.bf16.xpose.msra.mxu0 0
      %907 = vmatprep.subr.bf16.mxu0 0
      %908 = vmatpush1.bf16.xpose.msra.mxu0 0
      %909 = vmatprep.mubr.bf16.mxu0 0
      %910 = vmatmul.mubr.bf16.gmra.mrb[0].mxu0 %v872
      %v911 = vpop.f32.mrb[0].mxu0
      %v912 = vadd.f32 0.0, %v911
      %v913 = vpop.f32.mrb[0].mxu0
      %v914 = vpop.f32.mrb[0].mxu0
      %v915 = vpop.f32.mrb[0].mxu0
      %916 = vdwg.mxu0
      %v917 = vsel %vm693, %v912, -inf
      %918 = vmax.xlane.f32.xlu0 %v917
      %v919 = vpop.xlane.xlu0 %918
      %v920 = vsub.f32 %v912, %v919
      %v921 = vmul.f32 %v920, 1.442695
      %v922 = vpow.pop %v921
      %v923 = vsel %vm693, %v922, 0.0
      %924 = vadd.xlane.f32.xlu0 %v923
      %v925 = vpop.xlane.xlu0 %924
      %v926 = vrcp.pop %v925
      %v927 = vmul.f32 %v922, %v926
      %v928 = vpack.c.bf16 %v927, %v927
      %929 = vrot.lane.b32.xlu0 %v705, 64
      %v930 = vpop.permute.xlu0 %929
      %v932 = vsel %vm693, %v928, 0
      %v935 = vsel %vm710, %v930, 0
      %937 = vmatprep.subr.bf16.mxu0 0
      %938 = vmatpush1.bf16.msra.mxu0 %v935
      %939 = vmatprep.subr.bf16.mxu0 0
      %940 = vmatpush1.bf16.msra.mxu0 0
      %941 = vmatprep.subr.bf16.mxu0 0
      %942 = vmatpush1.bf16.msra.mxu0 0
      %943 = vmatprep.subr.bf16.mxu0 0
      %944 = vmatpush1.bf16.msra.mxu0 0
      %945 = vmatprep.subr.bf16.mxu0 0
      %946 = vmatpush1.bf16.msra.mxu0 0
      %947 = vmatprep.subr.bf16.mxu0 0
      %948 = vmatpush1.bf16.msra.mxu0 0
      %949 = vmatprep.subr.bf16.mxu0 0
      %950 = vmatpush1.bf16.msra.mxu0 0
      %951 = vmatprep.subr.bf16.mxu0 0
      %952 = vmatpush1.bf16.msra.mxu0 0
      %953 = vmatprep.subr.bf16.mxu0 0
      %954 = vmatpush1.bf16.msra.mxu0 0
      %955 = vmatprep.subr.bf16.mxu0 0
      %956 = vmatpush1.bf16.msra.mxu0 0
      %957 = vmatprep.subr.bf16.mxu0 0
      %958 = vmatpush1.bf16.msra.mxu0 0
      %959 = vmatprep.subr.bf16.mxu0 0
      %960 = vmatpush1.bf16.msra.mxu0 0
      %961 = vmatprep.subr.bf16.mxu0 0
      %962 = vmatpush1.bf16.msra.mxu0 0
      %963 = vmatprep.subr.bf16.mxu0 0
      %964 = vmatpush1.bf16.msra.mxu0 0
      %965 = vmatprep.subr.bf16.mxu0 0
      %966 = vmatpush1.bf16.msra.mxu0 0
      %967 = vmatprep.subr.bf16.mxu0 0
      %968 = vmatpush1.bf16.msra.mxu0 0
      %969 = vmatprep.mubr.bf16.mxu0 0
      %970 = vmatmul.mubr.bf16.gmra.mrb[0].mxu0 %v932
      %v971 = vpop.f32.mrb[0].mxu0
      %v972 = vadd.f32 0.0, %v971
      %v973 = vpop.f32.mrb[0].mxu0
      %v974 = vpop.f32.mrb[0].mxu0
      %v975 = vpop.f32.mrb[0].mxu0
      %976 = vdwg.mxu0
      %977 = vrot.lane.b32.xlu0 %v644, 32
      %v978 = vpop.permute.xlu0 %977
      %979 = vrot.lane.b32.xlu0 %v645, 32
      %v980 = vpop.permute.xlu0 %979
      %v982 = vsel %vm646, %v978, 0
      %v985 = vsel %vm646, %v980, 0
      %987 = vmatprep.subr.bf16.mxu0 0
      %988 = vmatpush1.bf16.xpose.msra.mxu0 %v985
      %989 = vmatprep.subr.bf16.mxu0 0
      %990 = vmatpush1.bf16.xpose.msra.mxu0 0
      %991 = vmatprep.subr.bf16.mxu0 0
      %992 = vmatpush1.bf16.xpose.msra.mxu0 0
      %993 = vmatprep.subr.bf16.mxu0 0
      %994 = vmatpush1.bf16.xpose.msra.mxu0 0
      %995 = vmatprep.subr.bf16.mxu0 0
      %996 = vmatpush1.bf16.xpose.msra.mxu0 0
      %997 = vmatprep.subr.bf16.mxu0 0
      %998 = vmatpush1.bf16.xpose.msra.mxu0 0
      %999 = vmatprep.subr.bf16.mxu0 0
      %1000 = vmatpush1.bf16.xpose.msra.mxu0 0
      %1001 = vmatprep.subr.bf16.mxu0 0
      %1002 = vmatpush1.bf16.xpose.msra.mxu0 0
      %1003 = vmatprep.subr.bf16.mxu0 0
      %1004 = vmatpush1.bf16.xpose.msra.mxu0 0
      %1005 = vmatprep.subr.bf16.mxu0 0
      %1006 = vmatpush1.bf16.xpose.msra.mxu0 0
      %1007 = vmatprep.subr.bf16.mxu0 0
      %1008 = vmatpush1.bf16.xpose.msra.mxu0 0
      %1009 = vmatprep.subr.bf16.mxu0 0
      %1010 = vmatpush1.bf16.xpose.msra.mxu0 0
      %1011 = vmatprep.subr.bf16.mxu0 0
      %1012 = vmatpush1.bf16.xpose.msra.mxu0 0
      %1013 = vmatprep.subr.bf16.mxu0 0
      %1014 = vmatpush1.bf16.xpose.msra.mxu0 0
      %1015 = vmatprep.subr.bf16.mxu0 0
      %1016 = vmatpush1.bf16.xpose.msra.mxu0 0
      %1017 = vmatprep.subr.bf16.mxu0 0
      %1018 = vmatpush1.bf16.xpose.msra.mxu0 0
      %1019 = vmatprep.mubr.bf16.mxu0 0
      %1020 = vmatmul.mubr.bf16.gmra.mrb[0].mxu0 %v982
      %v1021 = vpop.f32.mrb[0].mxu0
      %v1022 = vadd.f32 0.0, %v1021
      %v1023 = vpop.f32.mrb[0].mxu0
      %v1024 = vpop.f32.mrb[0].mxu0
      %v1025 = vpop.f32.mrb[0].mxu0
      %1026 = vdwg.mxu0
      %v1027 = vsel %vm693, %v1022, -inf
      %1028 = vmax.xlane.f32.xlu0 %v1027
      %v1029 = vpop.xlane.xlu0 %1028
      %v1030 = vsub.f32 %v1022, %v1029
      %v1031 = vmul.f32 %v1030, 1.442695
      %v1032 = vpow.pop %v1031
      %v1033 = vsel %vm693, %v1032, 0.0
      %1034 = vadd.xlane.f32.xlu0 %v1033
      %v1035 = vpop.xlane.xlu0 %1034
      %v1036 = vrcp.pop %v1035
      %v1037 = vmul.f32 %v1032, %v1036
      %v1038 = vpack.c.bf16 %v1037, %v1037
      %1039 = vrot.lane.b32.xlu0 %v705, 32
      %v1040 = vpop.permute.xlu0 %1039
      %v1042 = vsel %vm693, %v1038, 0
      %v1045 = vsel %vm710, %v1040, 0
      %1047 = vmatprep.subr.bf16.mxu0 0
      %1048 = vmatpush1.bf16.msra.mxu0 %v1045
      %1049 = vmatprep.subr.bf16.mxu0 0
      %1050 = vmatpush1.bf16.msra.mxu0 0
      %1051 = vmatprep.subr.bf16.mxu0 0
      %1052 = vmatpush1.bf16.msra.mxu0 0
      %1053 = vmatprep.subr.bf16.mxu0 0
      %1054 = vmatpush1.bf16.msra.mxu0 0
      %1055 = vmatprep.subr.bf16.mxu0 0
      %1056 = vmatpush1.bf16.msra.mxu0 0
      %1057 = vmatprep.subr.bf16.mxu0 0
      %1058 = vmatpush1.bf16.msra.mxu0 0
      %1059 = vmatprep.subr.bf16.mxu0 0
      %1060 = vmatpush1.bf16.msra.mxu0 0
      %1061 = vmatprep.subr.bf16.mxu0 0
      %1062 = vmatpush1.bf16.msra.mxu0 0
      %1063 = vmatprep.subr.bf16.mxu0 0
      %1064 = vmatpush1.bf16.msra.mxu0 0
      %1065 = vmatprep.subr.bf16.mxu0 0
      %1066 = vmatpush1.bf16.msra.mxu0 0
      %1067 = vmatprep.subr.bf16.mxu0 0
      %1068 = vmatpush1.bf16.msra.mxu0 0
      %1069 = vmatprep.subr.bf16.mxu0 0
      %1070 = vmatpush1.bf16.msra.mxu0 0
      %1071 = vmatprep.subr.bf16.mxu0 0
      %1072 = vmatpush1.bf16.msra.mxu0 0
      %1073 = vmatprep.subr.bf16.mxu0 0
      %1074 = vmatpush1.bf16.msra.mxu0 0
      %1075 = vmatprep.subr.bf16.mxu0 0
      %1076 = vmatpush1.bf16.msra.mxu0 0
      %1077 = vmatprep.subr.bf16.mxu0 0
      %1078 = vmatpush1.bf16.msra.mxu0 0
      %1079 = vmatprep.mubr.bf16.mxu0 0
      %1080 = vmatmul.mubr.bf16.gmra.mrb[0].mxu0 %v1042
      %v1081 = vpop.f32.mrb[0].mxu0
      %v1082 = vadd.f32 0.0, %v1081
      %v1083 = vpop.f32.mrb[0].mxu0
      %v1084 = vpop.f32.mrb[0].mxu0
      %v1085 = vpop.f32.mrb[0].mxu0
      %1086 = vdwg.mxu0
      %1088 = vrot.lane.b32.xlu0 %v862, 32
      %v1089 = vpop.permute.xlu0 %1088
      %1092 = vrot.lane.b32.xlu0 %v972, 64
      %v1093 = vpop.permute.xlu0 %1092
      %1096 = vrot.lane.b32.xlu0 %v1082, 96
      %v1097 = vpop.permute.xlu0 %1096
      %v1099 = vsel %vm646, %v749, %v1089
      %vm1100 = vcmask 523264
      %v1101 = vsel %vm1100, %v1099, %v1093
      %vm1102 = vcmask 785408
      %v1103 = vsel %vm1102, %v1101, %v1097
      %v1104 = vld [vmem:[%s5] sm:$0xf]
      %v1105 = vld [vmem:[%s5 + $0x4] sm:$0xf]
      %v1106 = vld [vmem:[%s5 + $0x8] sm:$0xf]
      %v1107 = vld [vmem:[%s5 + $0xc] sm:$0xf]
      %v1108 = vld [vmem:[%s5 + $0x10] sm:$0xf]
      %v1109 = vld [vmem:[%s5 + $0x14] sm:$0xf]
      %v1110 = vld [vmem:[%s5 + $0x18] sm:$0xf]
      %v1111 = vld [vmem:[%s5 + $0x1c] sm:$0xf]
      %v1112 = vld [vmem:[%s5 + $0x20] sm:$0xf]
      %v1113 = vld [vmem:[%s5 + $0x24] sm:$0xf]
      %v1114 = vld [vmem:[%s5 + $0x28] sm:$0xf]
      %v1115 = vld [vmem:[%s5 + $0x2c] sm:$0xf]
      %v1116 = vld [vmem:[%s5 + $0x30] sm:$0xf]
      %v1117 = vld [vmem:[%s5 + $0x34] sm:$0xf]
      %v1118 = vld [vmem:[%s5 + $0x38] sm:$0xf]
      %v1119 = vld [vmem:[%s5 + $0x3c] sm:$0xf]
      %v1120 = vpack.c.bf16 %v1103, %v1103
      %v1121 = vlaneseq
      %v1122 = vshrl.u32 %v1121, 7
      %v1123 = vsub.s32 0, %v1122
      %v1124 = vrot.slane %v376, %v1123
      %v1141 = vunpack.c.l.b16 %v1104
      %v1142 = vunpack.c.l.b16 %v1105
      %v1143 = vunpack.c.l.b16 %v1106
      %v1144 = vunpack.c.l.b16 %v1107
      %v1145 = vunpack.c.l.b16 %v1108
      %v1146 = vunpack.c.l.b16 %v1109
      %v1147 = vunpack.c.l.b16 %v1110
      %v1148 = vunpack.c.l.b16 %v1111
      %v1149 = vunpack.c.l.b16 %v1112
      %v1150 = vunpack.c.l.b16 %v1113
      %v1151 = vunpack.c.l.b16 %v1114
      %v1152 = vunpack.c.l.b16 %v1115
      %v1153 = vunpack.c.l.b16 %v1116
      %v1154 = vunpack.c.l.b16 %v1117
      %v1155 = vunpack.c.l.b16 %v1118
      %v1156 = vunpack.c.l.b16 %v1119
      %v1157 = vpack.c.b16 %v1142, %v1141
      %v1158 = vpack.c.b16 %v1144, %v1143
      %v1159 = vpack.c.b16 %v1146, %v1145
      %v1160 = vpack.c.b16 %v1148, %v1147
      %v1161 = vpack.c.b16 %v1150, %v1149
      %v1162 = vpack.c.b16 %v1152, %v1151
      %v1163 = vpack.c.b16 %v1154, %v1153
      %v1164 = vpack.c.b16 %v1156, %v1155
      %1173 = vmatprep.subr.bf16.mxu0 0
      %1174 = vmatpush1.bf16.msra.mxu0 %v1157
      %1175 = vmatprep.subr.bf16.mxu0 0
      %1176 = vmatpush1.bf16.msra.mxu0 %v1158
      %1177 = vmatprep.subr.bf16.mxu0 0
      %1178 = vmatpush1.bf16.msra.mxu0 %v1159
      %1179 = vmatprep.subr.bf16.mxu0 0
      %1180 = vmatpush1.bf16.msra.mxu0 %v1160
      %1181 = vmatprep.subr.bf16.mxu0 0
      %1182 = vmatpush1.bf16.msra.mxu0 %v1161
      %1183 = vmatprep.subr.bf16.mxu0 0
      %1184 = vmatpush1.bf16.msra.mxu0 %v1162
      %1185 = vmatprep.subr.bf16.mxu0 0
      %1186 = vmatpush1.bf16.msra.mxu0 %v1163
      %1187 = vmatprep.subr.bf16.mxu0 0
      %1188 = vmatpush1.bf16.msra.mxu0 %v1164
      %1189 = vmatprep.subr.bf16.mxu0 0
      %1190 = vmatpush1.bf16.msra.mxu0 0
      %1191 = vmatprep.subr.bf16.mxu0 0
      %1192 = vmatpush1.bf16.msra.mxu0 0
      %1193 = vmatprep.subr.bf16.mxu0 0
      %1194 = vmatpush1.bf16.msra.mxu0 0
      %1195 = vmatprep.subr.bf16.mxu0 0
      %1196 = vmatpush1.bf16.msra.mxu0 0
      %1197 = vmatprep.subr.bf16.mxu0 0
      %1198 = vmatpush1.bf16.msra.mxu0 0
      %1199 = vmatprep.subr.bf16.mxu0 0
      %1200 = vmatpush1.bf16.msra.mxu0 0
      %1201 = vmatprep.subr.bf16.mxu0 0
      %1202 = vmatpush1.bf16.msra.mxu0 0
      %1203 = vmatprep.subr.bf16.mxu0 0
      %1204 = vmatpush1.bf16.msra.mxu0 0
      %1205 = vmatprep.mubr.bf16.mxu0 0
      %1206 = vmatmul.mubr.bf16.gmra.mrb[0].mxu0 %v1120
      %v1207 = vpop.f32.mrb[0].mxu0
      %v1208 = vadd.f32 %v1124, %v1207
      %v1209 = vpop.f32.mrb[0].mxu0
      %v1210 = vpop.f32.mrb[0].mxu0
      %v1211 = vpop.f32.mrb[0].mxu0
      %1212 = vdwg.mxu0
      %s1214 = vtos %v383
      %v1215 = vstv %s1214
      %v1217 = vmul.f32 %v1215, %v1208
      %v1218 = vadd.f32 %v373, %v1217
      %1219 = vadd.xlane.f32.xlu0 %v1218
      %v1220 = vpop.xlane.xlu0 %1219
      %v1221 = vmul.f32 %v1220, 0.020833334
      %v1222 = vsub.f32 %v1218, %v1221
      %v1223 = vlaneseq
      %v1224 = vshrl.u32 %v1223, 7
      %v1225 = vsub.s32 0, %v1224
      %v1226 = vrot.slane %v382, %v1225
      %v1227 = vmul.f32 %v1222, %v1226
      %v1228 = vmul.f32 %v1227, %v1227
      %1229 = vadd.xlane.f32.xlu0 %v1228
      %v1230 = vpop.xlane.xlu0 %1229
      %v1231 = vmul.f32 %v1230, 0.020833334
      %v1232 = vadd.f32 %v1231, 1e-05
      %v1233 = vrsqrt.pop %v1232
      %v1234 = vmul.f32 %v1227, %v1233
      %v1235 = vlaneseq
      %v1236 = vshrl.u32 %v1235, 7
      %v1237 = vsub.s32 0, %v1236
      %v1238 = vrot.slane %v378, %v1237
      %v1239 = vmul.f32 %v1234, %v1238
      %v1240 = vlaneseq
      %v1241 = vshrl.u32 %v1240, 7
      %v1242 = vsub.s32 0, %v1241
      %v1243 = vrot.slane %v379, %v1242
      %v1244 = vadd.f32 %v1239, %v1243
      %v1245 = vld [vmem:[%s6] sm:$0xf]
      %v1246 = vld [vmem:[%s6 + $0x4] sm:$0xf]
      %v1247 = vld [vmem:[%s6 + $0x8] sm:$0xf]
      %v1248 = vld [vmem:[%s6 + $0xc] sm:$0xf]
      %v1249 = vld [vmem:[%s6 + $0x10] sm:$0xf]
      %v1250 = vld [vmem:[%s6 + $0x14] sm:$0xf]
      %v1251 = vld [vmem:[%s6 + $0x18] sm:$0xf]
      %v1252 = vld [vmem:[%s6 + $0x1c] sm:$0xf]
      %v1253 = vld [vmem:[%s6 + $0x20] sm:$0xf]
      %v1254 = vld [vmem:[%s6 + $0x24] sm:$0xf]
      %v1255 = vld [vmem:[%s6 + $0x28] sm:$0xf]
      %v1256 = vld [vmem:[%s6 + $0x2c] sm:$0xf]
      %v1257 = vld [vmem:[%s6 + $0x30] sm:$0xf]
      %v1258 = vld [vmem:[%s6 + $0x34] sm:$0xf]
      %v1259 = vld [vmem:[%s6 + $0x38] sm:$0xf]
      %v1260 = vld [vmem:[%s6 + $0x3c] sm:$0xf]
      %v1261 = vpack.c.bf16 %v1244, %v1244
      %v1262 = vld [vmem:[%s7] sm:$0x1]
      %v1264 = vlaneseq
      %v1265 = vshrl.u32 %v1264, 7
      %v1266 = vsub.s32 0, %v1265
      %v1267 = vrot.slane %v1262, %v1266
      %v1285 = vunpack.c.l.b16 %v1245
      %v1286 = vunpack.c.l.b16 %v1246
      %v1287 = vunpack.c.l.b16 %v1247
      %v1288 = vunpack.c.l.b16 %v1248
      %v1289 = vunpack.c.l.b16 %v1249
      %v1290 = vunpack.c.l.b16 %v1250
      %v1291 = vunpack.c.l.b16 %v1251
      %v1292 = vunpack.c.l.b16 %v1252
      %v1293 = vunpack.c.l.b16 %v1253
      %v1294 = vunpack.c.l.b16 %v1254
      %v1295 = vunpack.c.l.b16 %v1255
      %v1296 = vunpack.c.l.b16 %v1256
      %v1297 = vunpack.c.l.b16 %v1257
      %v1298 = vunpack.c.l.b16 %v1258
      %v1299 = vunpack.c.l.b16 %v1259
      %v1300 = vunpack.c.l.b16 %v1260
      %v1301 = vpack.c.b16 %v1286, %v1285
      %v1302 = vpack.c.b16 %v1288, %v1287
      %v1303 = vpack.c.b16 %v1290, %v1289
      %v1304 = vpack.c.b16 %v1292, %v1291
      %v1305 = vpack.c.b16 %v1294, %v1293
      %v1306 = vpack.c.b16 %v1296, %v1295
      %v1307 = vpack.c.b16 %v1298, %v1297
      %v1308 = vpack.c.b16 %v1300, %v1299
      %1317 = vmatprep.subr.bf16.mxu0 0
      %1318 = vmatpush1.bf16.msra.mxu0 %v1301
      %1319 = vmatprep.subr.bf16.mxu0 0
      %1320 = vmatpush1.bf16.msra.mxu0 %v1302
      %1321 = vmatprep.subr.bf16.mxu0 0
      %1322 = vmatpush1.bf16.msra.mxu0 %v1303
      %1323 = vmatprep.subr.bf16.mxu0 0
      %1324 = vmatpush1.bf16.msra.mxu0 %v1304
      %1325 = vmatprep.subr.bf16.mxu0 0
      %1326 = vmatpush1.bf16.msra.mxu0 %v1305
      %1327 = vmatprep.subr.bf16.mxu0 0
      %1328 = vmatpush1.bf16.msra.mxu0 %v1306
      %1329 = vmatprep.subr.bf16.mxu0 0
      %1330 = vmatpush1.bf16.msra.mxu0 %v1307
      %1331 = vmatprep.subr.bf16.mxu0 0
      %1332 = vmatpush1.bf16.msra.mxu0 %v1308
      %1333 = vmatprep.subr.bf16.mxu0 0
      %1334 = vmatpush1.bf16.msra.mxu0 0
      %1335 = vmatprep.subr.bf16.mxu0 0
      %1336 = vmatpush1.bf16.msra.mxu0 0
      %1337 = vmatprep.subr.bf16.mxu0 0
      %1338 = vmatpush1.bf16.msra.mxu0 0
      %1339 = vmatprep.subr.bf16.mxu0 0
      %1340 = vmatpush1.bf16.msra.mxu0 0
      %1341 = vmatprep.subr.bf16.mxu0 0
      %1342 = vmatpush1.bf16.msra.mxu0 0
      %1343 = vmatprep.subr.bf16.mxu0 0
      %1344 = vmatpush1.bf16.msra.mxu0 0
      %1345 = vmatprep.subr.bf16.mxu0 0
      %1346 = vmatpush1.bf16.msra.mxu0 0
      %1347 = vmatprep.subr.bf16.mxu0 0
      %1348 = vmatpush1.bf16.msra.mxu0 0
      %1349 = vmatprep.mubr.bf16.mxu0 0
      %1350 = vmatmul.mubr.bf16.gmra.mrb[0].mxu0 %v1261
      %v1351 = vpop.f32.mrb[0].mxu0
      %v1352 = vadd.f32 %v1267, %v1351
      %v1353 = vpop.f32.mrb[0].mxu0
      %v1354 = vpop.f32.mrb[0].mxu0
      %v1355 = vpop.f32.mrb[0].mxu0
      %1356 = vdwg.mxu0
      %v1357 = vmul.f32 %v1352, %v1352
      %v1358 = vmul.f32 %v1352, %v1357
      %v1359 = vmul.f32 %v1358, 0.044715
      %v1360 = vadd.f32 %v1352, %v1359
      %v1361 = vmul.f32 %v1360, 0.7978846
      %v1362 = vtanh.pop %v1361
      %v1363 = vadd.f32 %v1362, 1.0
      %v1364 = vmul.f32 %v1363, 0.5
      %v1365 = vmul.f32 %v1352, %v1364
      %v1366 = vld [vmem:[%s8] sm:$0xf]
      %v1367 = vld [vmem:[%s8 + $0x4] sm:$0xf]
      %v1368 = vld [vmem:[%s8 + $0x8] sm:$0xf]
      %v1369 = vld [vmem:[%s8 + $0xc] sm:$0xf]
      %v1370 = vld [vmem:[%s8 + $0x10] sm:$0xf]
      %v1371 = vld [vmem:[%s8 + $0x14] sm:$0xf]
      %v1372 = vld [vmem:[%s8 + $0x18] sm:$0xf]
      %v1373 = vld [vmem:[%s8 + $0x1c] sm:$0xf]
      %v1374 = vld [vmem:[%s8 + $0x20] sm:$0xf]
      %v1375 = vld [vmem:[%s8 + $0x24] sm:$0xf]
      %v1376 = vld [vmem:[%s8 + $0x28] sm:$0xf]
      %v1377 = vld [vmem:[%s8 + $0x2c] sm:$0xf]
      %v1378 = vld [vmem:[%s8 + $0x30] sm:$0xf]
      %v1379 = vld [vmem:[%s8 + $0x34] sm:$0xf]
      %v1380 = vld [vmem:[%s8 + $0x38] sm:$0xf]
      %v1381 = vld [vmem:[%s8 + $0x3c] sm:$0xf]
      %v1382 = vpack.c.bf16 %v1365, %v1365
      %v1383 = vlaneseq
      %v1384 = vshrl.u32 %v1383, 7
      %v1385 = vsub.s32 0, %v1384
      %v1386 = vrot.slane %v377, %v1385
      %v1403 = vunpack.c.l.b16 %v1366
      %v1404 = vunpack.c.l.b16 %v1367
      %v1405 = vunpack.c.l.b16 %v1368
      %v1406 = vunpack.c.l.b16 %v1369
      %v1407 = vunpack.c.l.b16 %v1370
      %v1408 = vunpack.c.l.b16 %v1371
      %v1409 = vunpack.c.l.b16 %v1372
      %v1410 = vunpack.c.l.b16 %v1373
      %v1411 = vunpack.c.l.b16 %v1374
      %v1412 = vunpack.c.l.b16 %v1375
      %v1413 = vunpack.c.l.b16 %v1376
      %v1414 = vunpack.c.l.b16 %v1377
      %v1415 = vunpack.c.l.b16 %v1378
      %v1416 = vunpack.c.l.b16 %v1379
      %v1417 = vunpack.c.l.b16 %v1380
      %v1418 = vunpack.c.l.b16 %v1381
      %v1419 = vpack.c.b16 %v1404, %v1403
      %v1420 = vpack.c.b16 %v1406, %v1405
      %v1421 = vpack.c.b16 %v1408, %v1407
      %v1422 = vpack.c.b16 %v1410, %v1409
      %v1423 = vpack.c.b16 %v1412, %v1411
      %v1424 = vpack.c.b16 %v1414, %v1413
      %v1425 = vpack.c.b16 %v1416, %v1415
      %v1426 = vpack.c.b16 %v1418, %v1417
      %1435 = vmatprep.subr.bf16.mxu0 0
      %1436 = vmatpush1.bf16.msra.mxu0 %v1419
      %1437 = vmatprep.subr.bf16.mxu0 0
      %1438 = vmatpush1.bf16.msra.mxu0 %v1420
      %1439 = vmatprep.subr.bf16.mxu0 0
      %1440 = vmatpush1.bf16.msra.mxu0 %v1421
      %1441 = vmatprep.subr.bf16.mxu0 0
      %1442 = vmatpush1.bf16.msra.mxu0 %v1422
      %1443 = vmatprep.subr.bf16.mxu0 0
      %1444 = vmatpush1.bf16.msra.mxu0 %v1423
      %1445 = vmatprep.subr.bf16.mxu0 0
      %1446 = vmatpush1.bf16.msra.mxu0 %v1424
      %1447 = vmatprep.subr.bf16.mxu0 0
      %1448 = vmatpush1.bf16.msra.mxu0 %v1425
      %1449 = vmatprep.subr.bf16.mxu0 0
      %1450 = vmatpush1.bf16.msra.mxu0 %v1426
      %1451 = vmatprep.subr.bf16.mxu0 0
      %1452 = vmatpush1.bf16.msra.mxu0 0
      %1453 = vmatprep.subr.bf16.mxu0 0
      %1454 = vmatpush1.bf16.msra.mxu0 0
      %1455 = vmatprep.subr.bf16.mxu0 0
      %1456 = vmatpush1.bf16.msra.mxu0 0
      %1457 = vmatprep.subr.bf16.mxu0 0
      %1458 = vmatpush1.bf16.msra.mxu0 0
      %1459 = vmatprep.subr.bf16.mxu0 0
      %1460 = vmatpush1.bf16.msra.mxu0 0
      %1461 = vmatprep.subr.bf16.mxu0 0
      %1462 = vmatpush1.bf16.msra.mxu0 0
      %1463 = vmatprep.subr.bf16.mxu0 0
      %1464 = vmatpush1.bf16.msra.mxu0 0
      %1465 = vmatprep.subr.bf16.mxu0 0
      %1466 = vmatpush1.bf16.msra.mxu0 0
      %1467 = vmatprep.mubr.bf16.mxu0 0
      %1468 = vmatmul.mubr.bf16.gmra.mrb[0].mxu0 %v1382
      %v1469 = vpop.f32.mrb[0].mxu0
      %v1470 = vadd.f32 %v1386, %v1469
      %v1471 = vpop.f32.mrb[0].mxu0
      %v1472 = vpop.f32.mrb[0].mxu0
      %v1473 = vpop.f32.mrb[0].mxu0
      %1474 = vdwg.mxu0
      %s1476 = vtos %v384
      %v1477 = vstv %s1476
      %v1479 = vmul.f32 %v1477, %v1470
      %v1480 = vadd.f32 %v1244, %v1479
      %1481 = vadd.xlane.f32.xlu0 %v1480
      %v1482 = vpop.xlane.xlu0 %1481
      %v1483 = vmul.f32 %v1482, 0.020833334
      %v1484 = vsub.f32 %v1480, %v1483
      %v1485 = vmul.f32 %v1484, %v1226
      %v1486 = vmul.f32 %v1485, %v1485
      %1487 = vadd.xlane.f32.xlu0 %v1486
      %v1488 = vpop.xlane.xlu0 %1487
      %v1489 = vmul.f32 %v1488, 0.020833334
      %v1490 = vadd.f32 %v1489, 1e-05
      %v1491 = vrsqrt.pop %v1490
      %v1492 = vmul.f32 %v1485, %v1491
      %v1493 = vlaneseq
      %v1494 = vshrl.u32 %v1493, 7
      %v1495 = vsub.s32 0, %v1494
      %v1496 = vrot.slane %v380, %v1495
      %v1497 = vmul.f32 %v1492, %v1496
      %v1498 = vlaneseq
      %v1499 = vshrl.u32 %v1498, 7
      %v1500 = vsub.s32 0, %v1499
      %v1501 = vrot.slane %v381, %v1500
      %v1502 = vadd.f32 %v1497, %v1501
      %1503 = vst [vmem:[%s371] sm:$0xff] %v1502
      %p1504 = scmp.lt.s32.totalorder %s21, 1
      %s1505 = scalar_select %p1504, %s21, 1
      %s1506 = smul.addr %s1505, 8
      %s1507 = scalar_lea.vmem %s10, %s1506
      // Predicated region
      $region61: #{layer_forward.8} parent=59 // pred_check
        %p1508 = pneg %p259
      $region62: #{layer_forward.8} parent=59 // pred_check_branch
        %1510 = sbr.rel (%p1508) target = $region64
      $region63: #{layer_forward.8} parent=59 // pred_region
        _
      $region64: #{layer_forward.8} parent=59 // pred_fallthru
        _
    $region60: #{layer_forward.8} parent=5 // pred_fallthru
      _
    %p1511 = scmp.le.s32.totalorder 2, %s16
    // Predicated region
    $region65: #{layer_forward.8} parent=5 // pred_check
      %p1512 = pneg %p1511
    $region66: #{layer_forward.8} parent=5 // pred_check_branch
      %1514 = sbr.rel (%p1512) target = $region68
    $region67: #{layer_forward.8} parent=5 // pred_region
      %s1515 = ssub.s32 %s16, 2
      // Predicated region
      $region69: #{layer_forward.8} parent=67 // pred_check
        %p1516 = pneg %p265
      $region70: #{layer_forward.8} parent=67 // pred_check_branch
        %1518 = sbr.rel (%p1516) target = $region72
      $region71: #{layer_forward.8} parent=67 // pred_region
        %p1519 = scmp.lt.s32.totalorder %s22, 1
        %s1520 = scalar_select %p1519, %s22, 1
        %s1521 = smul.addr %s1520, 8
        %s1522 = scalar_lea.vmem %s10, %s1521
      $region72: #{layer_forward.8} parent=67 // pred_fallthru
        _
    $region68: #{layer_forward.8} parent=5 // pred_fallthru
      _
  $region6: #{layer_forward.8} parent=0 // loop_footer
    %s20 = sadd.s32 1, %s16
  $region7: #{layer_forward.8} parent=0 // loop_footer_branch
    %15 = sbr.rel target = $region3
  $region8: #{layer_forward.8} parent=0 // loop_exit
    _

</llo_original>
